<compile_context>
chip_gen: v5e
topology: v5e:2x2
jax: 0.10.0
libtpu: 0.0.40
codegen_flags: <defaults>
</compile_context>

<pallas_src>
import functools

import jax
import jax.numpy as jnp
import numpy as np
from jax import lax
from jax.experimental import pallas as pl
from jax.experimental.pallas import tpu as pltpu


LANE = 128      # vreg lane width
SUBLANE = 8     # vreg sublane count


def _round_up(n, m):
    return ((n + m - 1) // m) * m


# -----------------------------------------------------------------------------
# Pallas kernel: whole sequence in one invocation
# -----------------------------------------------------------------------------
def gru_mlp_kernel(x_ref,        # (T*Bp, I)     all timesteps, batch padded
                   wi_ref,       # (I, 3*HP)     [W_ir | W_iz | W_in]^T, lane-aligned
                   wh_ref,       # (HP, 3*HP)    [W_hr | W_hz | W_hn]^T, lane-aligned
                   bi_ref,       # (1, 3*HP)     b_ih with b_hr/b_hz folded in
                   bn_ref,       # (1, HP)       b_hn only
                   wm_ref,       # (HP, IP)      MLP head weight^T (zero-padded)
                   bm_ref,       # (1, IP)       MLP head bias (zero-padded)
                   o_ref,        # (T*Bp, IP)    output (padded lanes/rows)
                   xp_ref,       # scratch: (T*Bp, 3*HP) hoisted input projection
                   *, seq_len, bpad, hpad):
    T, Bp, HP = seq_len, bpad, hpad

    # ---- Hoisted input projection: one batched matmul for all timesteps ----
    # (T*Bp, I) @ (I, 3*HP) + folded bias.  Parked in VMEM scratch so the
    # unrolled recurrence doesn't hold ~24 vregs of xproj live.
    xp_ref[...] = (jnp.dot(x_ref[...], wi_ref[...],
                           preferred_element_type=jnp.float32)
                   + bi_ref[...])

    wh = wh_ref[...]                                    # (HP, 3*HP)
    bn = jnp.broadcast_to(bn_ref[...], (Bp, HP))        # hoisted, emitted once

    # ---- Serial recurrence (h_0 = 0, PyTorch default) ----
    # One fused (Bp,HP) @ (HP,3*HP) matmul per step; gate slices are whole
    # 128-lane vreg selects.  Padded hidden lanes and padded batch rows stay
    # exactly zero (all padded weight/bias entries are zero).
    h = jnp.zeros((Bp, HP), jnp.float32)
    hs = []
    for t in range(T):                                  # T=8: fully unrolled
        xp = xp_ref[t * Bp:(t + 1) * Bp, :]             # aligned (8, 3*HP) load
        hp = jnp.dot(h, wh, preferred_element_type=jnp.float32)  # (Bp, 3*HP)

        # r_t = sigmoid(W_ir x + b_ir + W_hr h + b_hr)   (b_hr folded into xp)
        r = jax.nn.sigmoid(xp[:, 0:HP] + hp[:, 0:HP])
        # z_t = sigmoid(W_iz x + b_iz + W_hz h + b_hz)   (b_hz folded into xp)
        z = jax.nn.sigmoid(xp[:, HP:2 * HP] + hp[:, HP:2 * HP])
        # n_t = tanh(W_in x + b_in + r * (W_hn h + b_hn))
        n = jnp.tanh(xp[:, 2 * HP:3 * HP] + r * (hp[:, 2 * HP:3 * HP] + bn))
        # h_t = (1 - z) * n + z * h_{t-1}
        h = (1.0 - z) * n + z * h
        hs.append(h)

    # ---- Batched MLP head, off the serial path ----
    # (T*Bp, HP) @ (HP, IP) + b, single full-lane store of the output slab.
    hs_all = jnp.concatenate(hs, axis=0)                # (T*Bp, HP)
    o_ref[...] = (jnp.dot(hs_all, wm_ref[...],
                          preferred_element_type=jnp.float32)
                  + bm_ref[...])


# -----------------------------------------------------------------------------
# Wrapper
# -----------------------------------------------------------------------------
def musiclm_forward(x, p, hidden_size):
    """x: (T, B, I) float32.  Returns (T, B, I) float32."""
    T, B, I = x.shape
    HP = _round_up(hidden_size, LANE)
    IP = _round_up(I, LANE)
    Bp = _round_up(B, SUBLANE)

    # Zero-pad batch so each per-timestep slab is an exact 8-sublane tile.
    x_pad = jnp.zeros((T, Bp, I), jnp.float32).at[:, :B, :].set(x)
    x2d = x_pad.reshape(T * Bp, I)

    kernel = functools.partial(gru_mlp_kernel, seq_len=T, bpad=Bp, hpad=HP)
    vmem = lambda: pl.BlockSpec(memory_space=pltpu.MemorySpace.VMEM)

    y2d = pl.pallas_call(
        kernel,
        out_shape=jax.ShapeDtypeStruct((T * Bp, IP), jnp.float32),
        in_specs=[vmem() for _ in range(7)],
        out_specs=vmem(),
        scratch_shapes=[pltpu.VMEM((T * Bp, 3 * HP), jnp.float32)],
    )(x2d,
      p["wi_all"], p["wh_all"],
      p["bi_all"], p["bn"],
      p["wm_t"], p["b_m"])

    # Slice off batch / lane padding.
    return y2d.reshape(T, Bp, IP)[:, :B, :I]


# -----------------------------------------------------------------------------
# Deterministic parameter init (PyTorch-style uniform(-1/sqrt(H), 1/sqrt(H)))
# and lane-aligned packing for the kernel.
# -----------------------------------------------------------------------------
def init_params(key, input_size=88, hidden_size=46):
    I, H = input_size, hidden_size
    HP = _round_up(H, LANE)
    IP = _round_up(I, LANE)
    ks = jax.random.split(key, 6)
    bound = 1.0 / np.sqrt(H)
    u = lambda k, shape: jax.random.uniform(
        k, shape, jnp.float32, minval=-bound, maxval=bound)

    # PyTorch gate order in the stacked weights: r, z, n.
    w_ih = u(ks[0], (3 * H, I))
    w_hh = u(ks[1], (3 * H, H))
    b_ih = u(ks[2], (3 * H,))
    b_hh = u(ks[3], (3 * H,))
    w_mlp = u(ks[4], (I, H))
    b_mlp = u(ks[5], (I,))

    raw = {"w_ih": w_ih, "w_hh": w_hh, "b_ih": b_ih, "b_hh": b_hh,
           "w_mlp": w_mlp, "b_mlp": b_mlp}
    raw = {k: jnp.asarray(v, jnp.float32) for k, v in raw.items()}

    # Lane-aligned packing: gate g occupies lanes [g*HP, g*HP + H); all padded
    # lanes/rows are exactly zero (required so padded state stays zero).
    wi_all = jnp.zeros((I, 3 * HP), jnp.float32)
    wh_all = jnp.zeros((HP, 3 * HP), jnp.float32)
    for g in range(3):
        wi_all = wi_all.at[:, g * HP:g * HP + H].set(
            w_ih[g * H:(g + 1) * H, :].T)
        wh_all = wh_all.at[:H, g * HP:g * HP + H].set(
            w_hh[g * H:(g + 1) * H, :].T)

    # Fold b_hr / b_hz into the input-side bias (r/z gates are additive in the
    # two biases); keep b_hn separate (it is multiplied by r in the n gate).
    bi_all = jnp.zeros((1, 3 * HP), jnp.float32)
    bi_all = bi_all.at[0, 0 * HP:0 * HP + H].set(b_ih[0:H] + b_hh[0:H])
    bi_all = bi_all.at[0, 1 * HP:1 * HP + H].set(b_ih[H:2 * H] + b_hh[H:2 * H])
    bi_all = bi_all.at[0, 2 * HP:2 * HP + H].set(b_ih[2 * H:3 * H])
    bn = jnp.zeros((1, HP), jnp.float32).at[0, :H].set(b_hh[2 * H:3 * H])

    wm_t = jnp.zeros((HP, IP), jnp.float32).at[:H, :I].set(w_mlp.T)
    b_m = jnp.zeros((1, IP), jnp.float32).at[0, :I].set(b_mlp)

    packed = {"wi_all": wi_all, "wh_all": wh_all, "bi_all": bi_all,
              "bn": bn, "wm_t": wm_t, "b_m": b_m}
    return raw, packed


# -----------------------------------------------------------------------------
# Pure-JAX reference (semantics of torch.nn.GRU + nn.Linear), from raw params
# -----------------------------------------------------------------------------
def musiclm_reference(x, raw, hidden_size):
    T, B, I = x.shape
    H = hidden_size
    w_ih, w_hh = raw["w_ih"], raw["w_hh"]
    b_ih, b_hh = raw["b_ih"], raw["b_hh"]

    def step(h, x_t):
        gi = x_t @ w_ih.T + b_ih               # (B, 3H)
        gh = h @ w_hh.T + b_hh                 # (B, 3H)
        r = jax.nn.sigmoid(gi[:, :H] + gh[:, :H])
        z = jax.nn.sigmoid(gi[:, H:2 * H] + gh[:, H:2 * H])
        n = jnp.tanh(gi[:, 2 * H:] + r * gh[:, 2 * H:])
        h_new = (1.0 - z) * n + z * h
        return h_new, h_new

    h0 = jnp.zeros((B, H), jnp.float32)
    _, hs = lax.scan(step, h0, x)              # (T, B, H)
    return hs @ raw["w_mlp"].T + raw["b_mlp"]  # (T, B, I)


# -----------------------------------------------------------------------------
if __name__ == "__main__":
    T, B, I, H = 8, 2, 88, 46   # seq=8, batch=2, input_size=88, hidden_size=46

    key = jax.random.PRNGKey(0)
    kx, kp = jax.random.split(key)
    x = jax.random.normal(kx, (T, B, I), jnp.float32)
    raw_params, packed_params = init_params(kp, input_size=I, hidden_size=H)

    y = musiclm_forward(x, packed_params, hidden_size=H)
    y = jax.block_until_ready(y)

    y_ref = musiclm_reference(x, raw_params, H)
    np.testing.assert_allclose(np.asarray(y), np.asarray(y_ref),
                               rtol=1e-4, atol=1e-4)

    # TODO(synk): MusicLM.lm() (sigmoid on the logits) is trivial elementwise
    # glue and is left outside the kernel.
    print("KERNEL_OK")
</pallas_src>

<mosaic_0001>
module attributes {stable_mosaic.version = 11 : i64} {
  func.func @gru_mlp_kernel(%arg0: memref<64x88xf32, #tpu.memory_space<vmem>>, %arg1: memref<88x384xf32, #tpu.memory_space<vmem>>, %arg2: memref<128x384xf32, #tpu.memory_space<vmem>>, %arg3: memref<1x384xf32, #tpu.memory_space<vmem>>, %arg4: memref<1x128xf32, #tpu.memory_space<vmem>>, %arg5: memref<128x128xf32, #tpu.memory_space<vmem>>, %arg6: memref<1x128xf32, #tpu.memory_space<vmem>>, %arg7: memref<64x128xf32, #tpu.memory_space<vmem>>, %arg8: memref<64x384xf32, #tpu.memory_space<vmem>>) attributes {dimension_semantics = [], scalar_prefetch = 0 : i64, scratch_operands = 1 : i64, tpu.core_type = #tpu.core_type<tc>} {
    %c0 = arith.constant 0 : index
    %c0_0 = arith.constant 0 : index
    %0 = vector.load %arg0[%c0, %c0_0] : memref<64x88xf32, #tpu.memory_space<vmem>>, vector<64x88xf32>
    %c0_1 = arith.constant 0 : index
    %c0_2 = arith.constant 0 : index
    %1 = vector.load %arg1[%c0_1, %c0_2] : memref<88x384xf32, #tpu.memory_space<vmem>>, vector<88x384xf32>
    %cst = arith.constant dense<0.000000e+00> : vector<64x384xf32>
    %2 = tpu.matmul %0, %1, %cst {dimension_numbers = #tpu.dot_dimension_numbers<[1], [0], [0], [1], [0, 0, 1, 1], [], []>} : vector<64x88xf32>, vector<88x384xf32>, vector<64x384xf32> -> vector<64x384xf32>
    %c0_3 = arith.constant 0 : index
    %c0_4 = arith.constant 0 : index
    %3 = vector.load %arg3[%c0_3, %c0_4] : memref<1x384xf32, #tpu.memory_space<vmem>>, vector<1x384xf32>
    %4 = vector.broadcast %3 : vector<1x384xf32> to vector<64x384xf32>
    %5 = arith.addf %2, %4 : vector<64x384xf32>
    %c0_5 = arith.constant 0 : index
    %c0_6 = arith.constant 0 : index
    %6 = vector.load %arg8[%c0_5, %c0_6] : memref<64x384xf32, #tpu.memory_space<vmem>>, vector<64x384xf32>
    tpu.vector_store %arg8[%c0_5, %c0_6], %5 {strides = array<i32>} : memref<64x384xf32, #tpu.memory_space<vmem>>, vector<64x384xf32>,
    %c0_7 = arith.constant 0 : index
    %c0_8 = arith.constant 0 : index
    %7 = vector.load %arg2[%c0_7, %c0_8] : memref<128x384xf32, #tpu.memory_space<vmem>>, vector<128x384xf32>
    %c0_9 = arith.constant 0 : index
    %c0_10 = arith.constant 0 : index
    %8 = vector.load %arg4[%c0_9, %c0_10] : memref<1x128xf32, #tpu.memory_space<vmem>>, vector<1x128xf32>
    %9 = vector.shape_cast %8 : vector<1x128xf32> to vector<1x128xf32>
    %10 = vector.broadcast %9 : vector<1x128xf32> to vector<8x128xf32>
    %cst_11 = arith.constant 0.000000e+00 : f32
    %11 = vector.broadcast %cst_11 : f32 to vector<8x128xf32>
    %c0_12 = arith.constant 0 : index
    %c0_13 = arith.constant 0 : index
    %12 = vector.load %arg8[%c0_12, %c0_13] : memref<64x384xf32, #tpu.memory_space<vmem>>, vector<8x384xf32>
    %cst_14 = arith.constant dense<0.000000e+00> : vector<8x384xf32>
    %13 = tpu.matmul %11, %7, %cst_14 {dimension_numbers = #tpu.dot_dimension_numbers<[1], [0], [0], [1], [0, 0, 1, 1], [], []>} : vector<8x128xf32>, vector<128x384xf32>, vector<8x384xf32> -> vector<8x384xf32>
    %14 = vector.extract_strided_slice %12 {offsets = [0, 0], sizes = [8, 128], strides = [1, 1]} : vector<8x384xf32> to vector<8x128xf32>
    %15 = vector.extract_strided_slice %13 {offsets = [0, 0], sizes = [8, 128], strides = [1, 1]} : vector<8x384xf32> to vector<8x128xf32>
    %16 = arith.addf %14, %15 : vector<8x128xf32>
    %17 = arith.negf %16 : vector<8x128xf32>
    %18 = math.exp %17 : vector<8x128xf32>
    %cst_15 = arith.constant 1.000000e+00 : f32
    %19 = vector.broadcast %cst_15 : f32 to vector<8x128xf32>
    %20 = arith.addf %19, %18 : vector<8x128xf32>
    %21 = arith.divf %19, %20 : vector<8x128xf32>
    %22 = vector.extract_strided_slice %12 {offsets = [0, 128], sizes = [8, 128], strides = [1, 1]} : vector<8x384xf32> to vector<8x128xf32>
    %23 = vector.extract_strided_slice %13 {offsets = [0, 128], sizes = [8, 128], strides = [1, 1]} : vector<8x384xf32> to vector<8x128xf32>
    %24 = arith.addf %22, %23 : vector<8x128xf32>
    %25 = arith.negf %24 : vector<8x128xf32>
    %26 = math.exp %25 : vector<8x128xf32>
    %cst_16 = arith.constant 1.000000e+00 : f32
    %27 = vector.broadcast %cst_16 : f32 to vector<8x128xf32>
    %28 = arith.addf %27, %26 : vector<8x128xf32>
    %29 = arith.divf %27, %28 : vector<8x128xf32>
    %30 = vector.extract_strided_slice %12 {offsets = [0, 256], sizes = [8, 128], strides = [1, 1]} : vector<8x384xf32> to vector<8x128xf32>
    %31 = vector.extract_strided_slice %13 {offsets = [0, 256], sizes = [8, 128], strides = [1, 1]} : vector<8x384xf32> to vector<8x128xf32>
    %32 = arith.addf %31, %10 : vector<8x128xf32>
    %33 = arith.mulf %21, %32 : vector<8x128xf32>
    %34 = arith.addf %30, %33 : vector<8x128xf32>
    %35 = math.tanh %34 : vector<8x128xf32>
    %cst_17 = arith.constant 1.000000e+00 : f32
    %36 = vector.broadcast %cst_17 : f32 to vector<8x128xf32>
    %37 = arith.subf %36, %29 : vector<8x128xf32>
    %38 = arith.mulf %37, %35 : vector<8x128xf32>
    %39 = arith.mulf %29, %11 : vector<8x128xf32>
    %40 = arith.addf %38, %39 : vector<8x128xf32>
    %c8 = arith.constant 8 : index
    %c0_18 = arith.constant 0 : index
    %41 = vector.load %arg8[%c8, %c0_18] : memref<64x384xf32, #tpu.memory_space<vmem>>, vector<8x384xf32>
    %cst_19 = arith.constant dense<0.000000e+00> : vector<8x384xf32>
    %42 = tpu.matmul %40, %7, %cst_19 {dimension_numbers = #tpu.dot_dimension_numbers<[1], [0], [0], [1], [0, 0, 1, 1], [], []>} : vector<8x128xf32>, vector<128x384xf32>, vector<8x384xf32> -> vector<8x384xf32>
    %43 = vector.extract_strided_slice %41 {offsets = [0, 0], sizes = [8, 128], strides = [1, 1]} : vector<8x384xf32> to vector<8x128xf32>
    %44 = vector.extract_strided_slice %42 {offsets = [0, 0], sizes = [8, 128], strides = [1, 1]} : vector<8x384xf32> to vector<8x128xf32>
    %45 = arith.addf %43, %44 : vector<8x128xf32>
    %46 = arith.negf %45 : vector<8x128xf32>
    %47 = math.exp %46 : vector<8x128xf32>
    %cst_20 = arith.constant 1.000000e+00 : f32
    %48 = vector.broadcast %cst_20 : f32 to vector<8x128xf32>
    %49 = arith.addf %48, %47 : vector<8x128xf32>
    %50 = arith.divf %48, %49 : vector<8x128xf32>
    %51 = vector.extract_strided_slice %41 {offsets = [0, 128], sizes = [8, 128], strides = [1, 1]} : vector<8x384xf32> to vector<8x128xf32>
    %52 = vector.extract_strided_slice %42 {offsets = [0, 128], sizes = [8, 128], strides = [1, 1]} : vector<8x384xf32> to vector<8x128xf32>
    %53 = arith.addf %51, %52 : vector<8x128xf32>
    %54 = arith.negf %53 : vector<8x128xf32>
    %55 = math.exp %54 : vector<8x128xf32>
    %cst_21 = arith.constant 1.000000e+00 : f32
    %56 = vector.broadcast %cst_21 : f32 to vector<8x128xf32>
    %57 = arith.addf %56, %55 : vector<8x128xf32>
    %58 = arith.divf %56, %57 : vector<8x128xf32>
    %59 = vector.extract_strided_slice %41 {offsets = [0, 256], sizes = [8, 128], strides = [1, 1]} : vector<8x384xf32> to vector<8x128xf32>
    %60 = vector.extract_strided_slice %42 {offsets = [0, 256], sizes = [8, 128], strides = [1, 1]} : vector<8x384xf32> to vector<8x128xf32>
    %61 = arith.addf %60, %10 : vector<8x128xf32>
    %62 = arith.mulf %50, %61 : vector<8x128xf32>
    %63 = arith.addf %59, %62 : vector<8x128xf32>
    %64 = math.tanh %63 : vector<8x128xf32>
    %cst_22 = arith.constant 1.000000e+00 : f32
    %65 = vector.broadcast %cst_22 : f32 to vector<8x128xf32>
    %66 = arith.subf %65, %58 : vector<8x128xf32>
    %67 = arith.mulf %66, %64 : vector<8x128xf32>
    %68 = arith.mulf %58, %40 : vector<8x128xf32>
    %69 = arith.addf %67, %68 : vector<8x128xf32>
    %c16 = arith.constant 16 : index
    %c0_23 = arith.constant 0 : index
    %70 = vector.load %arg8[%c16, %c0_23] : memref<64x384xf32, #tpu.memory_space<vmem>>, vector<8x384xf32>
    %cst_24 = arith.constant dense<0.000000e+00> : vector<8x384xf32>
    %71 = tpu.matmul %69, %7, %cst_24 {dimension_numbers = #tpu.dot_dimension_numbers<[1], [0], [0], [1], [0, 0, 1, 1], [], []>} : vector<8x128xf32>, vector<128x384xf32>, vector<8x384xf32> -> vector<8x384xf32>
    %72 = vector.extract_strided_slice %70 {offsets = [0, 0], sizes = [8, 128], strides = [1, 1]} : vector<8x384xf32> to vector<8x128xf32>
    %73 = vector.extract_strided_slice %71 {offsets = [0, 0], sizes = [8, 128], strides = [1, 1]} : vector<8x384xf32> to vector<8x128xf32>
    %74 = arith.addf %72, %73 : vector<8x128xf32>
    %75 = arith.negf %74 : vector<8x128xf32>
    %76 = math.exp %75 : vector<8x128xf32>
    %cst_25 = arith.constant 1.000000e+00 : f32
    %77 = vector.broadcast %cst_25 : f32 to vector<8x128xf32>
    %78 = arith.addf %77, %76 : vector<8x128xf32>
    %79 = arith.divf %77, %78 : vector<8x128xf32>
    %80 = vector.extract_strided_slice %70 {offsets = [0, 128], sizes = [8, 128], strides = [1, 1]} : vector<8x384xf32> to vector<8x128xf32>
    %81 = vector.extract_strided_slice %71 {offsets = [0, 128], sizes = [8, 128], strides = [1, 1]} : vector<8x384xf32> to vector<8x128xf32>
    %82 = arith.addf %80, %81 : vector<8x128xf32>
    %83 = arith.negf %82 : vector<8x128xf32>
    %84 = math.exp %83 : vector<8x128xf32>
    %cst_26 = arith.constant 1.000000e+00 : f32
    %85 = vector.broadcast %cst_26 : f32 to vector<8x128xf32>
    %86 = arith.addf %85, %84 : vector<8x128xf32>
    %87 = arith.divf %85, %86 : vector<8x128xf32>
    %88 = vector.extract_strided_slice %70 {offsets = [0, 256], sizes = [8, 128], strides = [1, 1]} : vector<8x384xf32> to vector<8x128xf32>
    %89 = vector.extract_strided_slice %71 {offsets = [0, 256], sizes = [8, 128], strides = [1, 1]} : vector<8x384xf32> to vector<8x128xf32>
    %90 = arith.addf %89, %10 : vector<8x128xf32>
    %91 = arith.mulf %79, %90 : vector<8x128xf32>
    %92 = arith.addf %88, %91 : vector<8x128xf32>
    %93 = math.tanh %92 : vector<8x128xf32>
    %cst_27 = arith.constant 1.000000e+00 : f32
    %94 = vector.broadcast %cst_27 : f32 to vector<8x128xf32>
    %95 = arith.subf %94, %87 : vector<8x128xf32>
    %96 = arith.mulf %95, %93 : vector<8x128xf32>
    %97 = arith.mulf %87, %69 : vector<8x128xf32>
    %98 = arith.addf %96, %97 : vector<8x128xf32>
    %c24 = arith.constant 24 : index
    %c0_28 = arith.constant 0 : index
    %99 = vector.load %arg8[%c24, %c0_28] : memref<64x384xf32, #tpu.memory_space<vmem>>, vector<8x384xf32>
    %cst_29 = arith.constant dense<0.000000e+00> : vector<8x384xf32>
    %100 = tpu.matmul %98, %7, %cst_29 {dimension_numbers = #tpu.dot_dimension_numbers<[1], [0], [0], [1], [0, 0, 1, 1], [], []>} : vector<8x128xf32>, vector<128x384xf32>, vector<8x384xf32> -> vector<8x384xf32>
    %101 = vector.extract_strided_slice %99 {offsets = [0, 0], sizes = [8, 128], strides = [1, 1]} : vector<8x384xf32> to vector<8x128xf32>
    %102 = vector.extract_strided_slice %100 {offsets = [0, 0], sizes = [8, 128], strides = [1, 1]} : vector<8x384xf32> to vector<8x128xf32>
    %103 = arith.addf %101, %102 : vector<8x128xf32>
    %104 = arith.negf %103 : vector<8x128xf32>
    %105 = math.exp %104 : vector<8x128xf32>
    %cst_30 = arith.constant 1.000000e+00 : f32
    %106 = vector.broadcast %cst_30 : f32 to vector<8x128xf32>
    %107 = arith.addf %106, %105 : vector<8x128xf32>
    %108 = arith.divf %106, %107 : vector<8x128xf32>
    %109 = vector.extract_strided_slice %99 {offsets = [0, 128], sizes = [8, 128], strides = [1, 1]} : vector<8x384xf32> to vector<8x128xf32>
    %110 = vector.extract_strided_slice %100 {offsets = [0, 128], sizes = [8, 128], strides = [1, 1]} : vector<8x384xf32> to vector<8x128xf32>
    %111 = arith.addf %109, %110 : vector<8x128xf32>
    %112 = arith.negf %111 : vector<8x128xf32>
    %113 = math.exp %112 : vector<8x128xf32>
    %cst_31 = arith.constant 1.000000e+00 : f32
    %114 = vector.broadcast %cst_31 : f32 to vector<8x128xf32>
    %115 = arith.addf %114, %113 : vector<8x128xf32>
    %116 = arith.divf %114, %115 : vector<8x128xf32>
    %117 = vector.extract_strided_slice %99 {offsets = [0, 256], sizes = [8, 128], strides = [1, 1]} : vector<8x384xf32> to vector<8x128xf32>
    %118 = vector.extract_strided_slice %100 {offsets = [0, 256], sizes = [8, 128], strides = [1, 1]} : vector<8x384xf32> to vector<8x128xf32>
    %119 = arith.addf %118, %10 : vector<8x128xf32>
    %120 = arith.mulf %108, %119 : vector<8x128xf32>
    %121 = arith.addf %117, %120 : vector<8x128xf32>
    %122 = math.tanh %121 : vector<8x128xf32>
    %cst_32 = arith.constant 1.000000e+00 : f32
    %123 = vector.broadcast %cst_32 : f32 to vector<8x128xf32>
    %124 = arith.subf %123, %116 : vector<8x128xf32>
    %125 = arith.mulf %124, %122 : vector<8x128xf32>
    %126 = arith.mulf %116, %98 : vector<8x128xf32>
    %127 = arith.addf %125, %126 : vector<8x128xf32>
    %c32 = arith.constant 32 : index
    %c0_33 = arith.constant 0 : index
    %128 = vector.load %arg8[%c32, %c0_33] : memref<64x384xf32, #tpu.memory_space<vmem>>, vector<8x384xf32>
    %cst_34 = arith.constant dense<0.000000e+00> : vector<8x384xf32>
    %129 = tpu.matmul %127, %7, %cst_34 {dimension_numbers = #tpu.dot_dimension_numbers<[1], [0], [0], [1], [0, 0, 1, 1], [], []>} : vector<8x128xf32>, vector<128x384xf32>, vector<8x384xf32> -> vector<8x384xf32>
    %130 = vector.extract_strided_slice %128 {offsets = [0, 0], sizes = [8, 128], strides = [1, 1]} : vector<8x384xf32> to vector<8x128xf32>
    %131 = vector.extract_strided_slice %129 {offsets = [0, 0], sizes = [8, 128], strides = [1, 1]} : vector<8x384xf32> to vector<8x128xf32>
    %132 = arith.addf %130, %131 : vector<8x128xf32>
    %133 = arith.negf %132 : vector<8x128xf32>
    %134 = math.exp %133 : vector<8x128xf32>
    %cst_35 = arith.constant 1.000000e+00 : f32
    %135 = vector.broadcast %cst_35 : f32 to vector<8x128xf32>
    %136 = arith.addf %135, %134 : vector<8x128xf32>
    %137 = arith.divf %135, %136 : vector<8x128xf32>
    %138 = vector.extract_strided_slice %128 {offsets = [0, 128], sizes = [8, 128], strides = [1, 1]} : vector<8x384xf32> to vector<8x128xf32>
    %139 = vector.extract_strided_slice %129 {offsets = [0, 128], sizes = [8, 128], strides = [1, 1]} : vector<8x384xf32> to vector<8x128xf32>
    %140 = arith.addf %138, %139 : vector<8x128xf32>
    %141 = arith.negf %140 : vector<8x128xf32>
    %142 = math.exp %141 : vector<8x128xf32>
    %cst_36 = arith.constant 1.000000e+00 : f32
    %143 = vector.broadcast %cst_36 : f32 to vector<8x128xf32>
    %144 = arith.addf %143, %142 : vector<8x128xf32>
    %145 = arith.divf %143, %144 : vector<8x128xf32>
    %146 = vector.extract_strided_slice %128 {offsets = [0, 256], sizes = [8, 128], strides = [1, 1]} : vector<8x384xf32> to vector<8x128xf32>
    %147 = vector.extract_strided_slice %129 {offsets = [0, 256], sizes = [8, 128], strides = [1, 1]} : vector<8x384xf32> to vector<8x128xf32>
    %148 = arith.addf %147, %10 : vector<8x128xf32>
    %149 = arith.mulf %137, %148 : vector<8x128xf32>
    %150 = arith.addf %146, %149 : vector<8x128xf32>
    %151 = math.tanh %150 : vector<8x128xf32>
    %cst_37 = arith.constant 1.000000e+00 : f32
    %152 = vector.broadcast %cst_37 : f32 to vector<8x128xf32>
    %153 = arith.subf %152, %145 : vector<8x128xf32>
    %154 = arith.mulf %153, %151 : vector<8x128xf32>
    %155 = arith.mulf %145, %127 : vector<8x128xf32>
    %156 = arith.addf %154, %155 : vector<8x128xf32>
    %c40 = arith.constant 40 : index
    %c0_38 = arith.constant 0 : index
    %157 = vector.load %arg8[%c40, %c0_38] : memref<64x384xf32, #tpu.memory_space<vmem>>, vector<8x384xf32>
    %cst_39 = arith.constant dense<0.000000e+00> : vector<8x384xf32>
    %158 = tpu.matmul %156, %7, %cst_39 {dimension_numbers = #tpu.dot_dimension_numbers<[1], [0], [0], [1], [0, 0, 1, 1], [], []>} : vector<8x128xf32>, vector<128x384xf32>, vector<8x384xf32> -> vector<8x384xf32>
    %159 = vector.extract_strided_slice %157 {offsets = [0, 0], sizes = [8, 128], strides = [1, 1]} : vector<8x384xf32> to vector<8x128xf32>
    %160 = vector.extract_strided_slice %158 {offsets = [0, 0], sizes = [8, 128], strides = [1, 1]} : vector<8x384xf32> to vector<8x128xf32>
    %161 = arith.addf %159, %160 : vector<8x128xf32>
    %162 = arith.negf %161 : vector<8x128xf32>
    %163 = math.exp %162 : vector<8x128xf32>
    %cst_40 = arith.constant 1.000000e+00 : f32
    %164 = vector.broadcast %cst_40 : f32 to vector<8x128xf32>
    %165 = arith.addf %164, %163 : vector<8x128xf32>
    %166 = arith.divf %164, %165 : vector<8x128xf32>
    %167 = vector.extract_strided_slice %157 {offsets = [0, 128], sizes = [8, 128], strides = [1, 1]} : vector<8x384xf32> to vector<8x128xf32>
    %168 = vector.extract_strided_slice %158 {offsets = [0, 128], sizes = [8, 128], strides = [1, 1]} : vector<8x384xf32> to vector<8x128xf32>
    %169 = arith.addf %167, %168 : vector<8x128xf32>
    %170 = arith.negf %169 : vector<8x128xf32>
    %171 = math.exp %170 : vector<8x128xf32>
    %cst_41 = arith.constant 1.000000e+00 : f32
    %172 = vector.broadcast %cst_41 : f32 to vector<8x128xf32>
    %173 = arith.addf %172, %171 : vector<8x128xf32>
    %174 = arith.divf %172, %173 : vector<8x128xf32>
    %175 = vector.extract_strided_slice %157 {offsets = [0, 256], sizes = [8, 128], strides = [1, 1]} : vector<8x384xf32> to vector<8x128xf32>
    %176 = vector.extract_strided_slice %158 {offsets = [0, 256], sizes = [8, 128], strides = [1, 1]} : vector<8x384xf32> to vector<8x128xf32>
    %177 = arith.addf %176, %10 : vector<8x128xf32>
    %178 = arith.mulf %166, %177 : vector<8x128xf32>
    %179 = arith.addf %175, %178 : vector<8x128xf32>
    %180 = math.tanh %179 : vector<8x128xf32>
    %cst_42 = arith.constant 1.000000e+00 : f32
    %181 = vector.broadcast %cst_42 : f32 to vector<8x128xf32>
    %182 = arith.subf %181, %174 : vector<8x128xf32>
    %183 = arith.mulf %182, %180 : vector<8x128xf32>
    %184 = arith.mulf %174, %156 : vector<8x128xf32>
    %185 = arith.addf %183, %184 : vector<8x128xf32>
    %c48 = arith.constant 48 : index
    %c0_43 = arith.constant 0 : index
    %186 = vector.load %arg8[%c48, %c0_43] : memref<64x384xf32, #tpu.memory_space<vmem>>, vector<8x384xf32>
    %cst_44 = arith.constant dense<0.000000e+00> : vector<8x384xf32>
    %187 = tpu.matmul %185, %7, %cst_44 {dimension_numbers = #tpu.dot_dimension_numbers<[1], [0], [0], [1], [0, 0, 1, 1], [], []>} : vector<8x128xf32>, vector<128x384xf32>, vector<8x384xf32> -> vector<8x384xf32>
    %188 = vector.extract_strided_slice %186 {offsets = [0, 0], sizes = [8, 128], strides = [1, 1]} : vector<8x384xf32> to vector<8x128xf32>
    %189 = vector.extract_strided_slice %187 {offsets = [0, 0], sizes = [8, 128], strides = [1, 1]} : vector<8x384xf32> to vector<8x128xf32>
    %190 = arith.addf %188, %189 : vector<8x128xf32>
    %191 = arith.negf %190 : vector<8x128xf32>
    %192 = math.exp %191 : vector<8x128xf32>
    %cst_45 = arith.constant 1.000000e+00 : f32
    %193 = vector.broadcast %cst_45 : f32 to vector<8x128xf32>
    %194 = arith.addf %193, %192 : vector<8x128xf32>
    %195 = arith.divf %193, %194 : vector<8x128xf32>
    %196 = vector.extract_strided_slice %186 {offsets = [0, 128], sizes = [8, 128], strides = [1, 1]} : vector<8x384xf32> to vector<8x128xf32>
    %197 = vector.extract_strided_slice %187 {offsets = [0, 128], sizes = [8, 128], strides = [1, 1]} : vector<8x384xf32> to vector<8x128xf32>
    %198 = arith.addf %196, %197 : vector<8x128xf32>
    %199 = arith.negf %198 : vector<8x128xf32>
    %200 = math.exp %199 : vector<8x128xf32>
    %cst_46 = arith.constant 1.000000e+00 : f32
    %201 = vector.broadcast %cst_46 : f32 to vector<8x128xf32>
    %202 = arith.addf %201, %200 : vector<8x128xf32>
    %203 = arith.divf %201, %202 : vector<8x128xf32>
    %204 = vector.extract_strided_slice %186 {offsets = [0, 256], sizes = [8, 128], strides = [1, 1]} : vector<8x384xf32> to vector<8x128xf32>
    %205 = vector.extract_strided_slice %187 {offsets = [0, 256], sizes = [8, 128], strides = [1, 1]} : vector<8x384xf32> to vector<8x128xf32>
    %206 = arith.addf %205, %10 : vector<8x128xf32>
    %207 = arith.mulf %195, %206 : vector<8x128xf32>
    %208 = arith.addf %204, %207 : vector<8x128xf32>
    %209 = math.tanh %208 : vector<8x128xf32>
    %cst_47 = arith.constant 1.000000e+00 : f32
    %210 = vector.broadcast %cst_47 : f32 to vector<8x128xf32>
    %211 = arith.subf %210, %203 : vector<8x128xf32>
    %212 = arith.mulf %211, %209 : vector<8x128xf32>
    %213 = arith.mulf %203, %185 : vector<8x128xf32>
    %214 = arith.addf %212, %213 : vector<8x128xf32>
    %c56 = arith.constant 56 : index
    %c0_48 = arith.constant 0 : index
    %215 = vector.load %arg8[%c56, %c0_48] : memref<64x384xf32, #tpu.memory_space<vmem>>, vector<8x384xf32>
    %cst_49 = arith.constant dense<0.000000e+00> : vector<8x384xf32>
    %216 = tpu.matmul %214, %7, %cst_49 {dimension_numbers = #tpu.dot_dimension_numbers<[1], [0], [0], [1], [0, 0, 1, 1], [], []>} : vector<8x128xf32>, vector<128x384xf32>, vector<8x384xf32> -> vector<8x384xf32>
    %217 = vector.extract_strided_slice %215 {offsets = [0, 0], sizes = [8, 128], strides = [1, 1]} : vector<8x384xf32> to vector<8x128xf32>
    %218 = vector.extract_strided_slice %216 {offsets = [0, 0], sizes = [8, 128], strides = [1, 1]} : vector<8x384xf32> to vector<8x128xf32>
    %219 = arith.addf %217, %218 : vector<8x128xf32>
    %220 = arith.negf %219 : vector<8x128xf32>
    %221 = math.exp %220 : vector<8x128xf32>
    %cst_50 = arith.constant 1.000000e+00 : f32
    %222 = vector.broadcast %cst_50 : f32 to vector<8x128xf32>
    %223 = arith.addf %222, %221 : vector<8x128xf32>
    %224 = arith.divf %222, %223 : vector<8x128xf32>
    %225 = vector.extract_strided_slice %215 {offsets = [0, 128], sizes = [8, 128], strides = [1, 1]} : vector<8x384xf32> to vector<8x128xf32>
    %226 = vector.extract_strided_slice %216 {offsets = [0, 128], sizes = [8, 128], strides = [1, 1]} : vector<8x384xf32> to vector<8x128xf32>
    %227 = arith.addf %225, %226 : vector<8x128xf32>
    %228 = arith.negf %227 : vector<8x128xf32>
    %229 = math.exp %228 : vector<8x128xf32>
    %cst_51 = arith.constant 1.000000e+00 : f32
    %230 = vector.broadcast %cst_51 : f32 to vector<8x128xf32>
    %231 = arith.addf %230, %229 : vector<8x128xf32>
    %232 = arith.divf %230, %231 : vector<8x128xf32>
    %233 = vector.extract_strided_slice %215 {offsets = [0, 256], sizes = [8, 128], strides = [1, 1]} : vector<8x384xf32> to vector<8x128xf32>
    %234 = vector.extract_strided_slice %216 {offsets = [0, 256], sizes = [8, 128], strides = [1, 1]} : vector<8x384xf32> to vector<8x128xf32>
    %235 = arith.addf %234, %10 : vector<8x128xf32>
    %236 = arith.mulf %224, %235 : vector<8x128xf32>
    %237 = arith.addf %233, %236 : vector<8x128xf32>
    %238 = math.tanh %237 : vector<8x128xf32>
    %cst_52 = arith.constant 1.000000e+00 : f32
    %239 = vector.broadcast %cst_52 : f32 to vector<8x128xf32>
    %240 = arith.subf %239, %232 : vector<8x128xf32>
    %241 = arith.mulf %240, %238 : vector<8x128xf32>
    %242 = arith.mulf %232, %214 : vector<8x128xf32>
    %243 = arith.addf %241, %242 : vector<8x128xf32>
    %244 = tpu.concatenate %40, %69, %98, %127, %156, %185, %214, %243 in 0 : vector<8x128xf32>, vector<8x128xf32>, vector<8x128xf32>, vector<8x128xf32>, vector<8x128xf32>, vector<8x128xf32>, vector<8x128xf32>, vector<8x128xf32> -> vector<64x128xf32>
    %c0_53 = arith.constant 0 : index
    %c0_54 = arith.constant 0 : index
    %245 = vector.load %arg5[%c0_53, %c0_54] : memref<128x128xf32, #tpu.memory_space<vmem>>, vector<128x128xf32>
    %cst_55 = arith.constant dense<0.000000e+00> : vector<64x128xf32>
    %246 = tpu.matmul %244, %245, %cst_55 {dimension_numbers = #tpu.dot_dimension_numbers<[1], [0], [0], [1], [0, 0, 1, 1], [], []>} : vector<64x128xf32>, vector<128x128xf32>, vector<64x128xf32> -> vector<64x128xf32>
    %c0_56 = arith.constant 0 : index
    %c0_57 = arith.constant 0 : index
    %247 = vector.load %arg6[%c0_56, %c0_57] : memref<1x128xf32, #tpu.memory_space<vmem>>, vector<1x128xf32>
    %248 = vector.broadcast %247 : vector<1x128xf32> to vector<64x128xf32>
    %249 = arith.addf %246, %248 : vector<64x128xf32>
    %c0_58 = arith.constant 0 : index
    %c0_59 = arith.constant 0 : index
    %250 = vector.load %arg7[%c0_58, %c0_59] : memref<64x128xf32, #tpu.memory_space<vmem>>, vector<64x128xf32>
    tpu.vector_store %arg7[%c0_58, %c0_59], %249 {strides = array<i32>} : memref<64x128xf32, #tpu.memory_space<vmem>>, vector<64x128xf32>,
    return
  }
}

</mosaic_0001>

<llo_original>
// kernel: tpu_custom_call.1
$region0: #{tpu_custom_call.1}
  #allocation0 [shape = 'u32[]', space=smem, size = 0x4, offset = 0x4, fixed_abs, tag = 'smem constant byte address 0x4 - core index']
  #allocation1 [shape = 'u32[72,128]{1,0:T(1,128)}', space=vmem, size = 0x9000, scoped, tag = 'internal scratch']
  #allocation2 [shape = 'f32[64,384]{1,0:T(8,128)}', space=vmem, size = 0x18000, scoped, tag = 'scratch operand']
  %s0 = inlined_call_operand.hbm [shape: f32[64,88], index: 0, kind: input, shape index: {}]
  %s1 = inlined_call_operand.hbm [shape: f32[88,384], index: 1, kind: input, shape index: {}]
  %s2 = inlined_call_operand.hbm [shape: f32[128,384], index: 2, kind: input, shape index: {}]
  %s3 = inlined_call_operand.hbm [shape: f32[1,384], index: 3, kind: input, shape index: {}]
  %s4 = inlined_call_operand.vmem [shape: f32[1,128], index: 4, kind: input, shape index: {}]
  %s5 = inlined_call_operand.hbm [shape: f32[128,128], index: 5, kind: input, shape index: {}]
  %s6 = inlined_call_operand.vmem [shape: f32[1,128], index: 6, kind: input, shape index: {}]
  %s7 = inlined_call_operand.hbm [shape: f32[64,128], index: 7, kind: output, shape index: {}]
  %s8 = sld [smem:[#allocation0]]
  $region58: #{tpu_custom_call.1} parent=0
    _
  %s10 = ssub.s32 1, %s8
  %s11 = scalar_select 0, %s10, %s8
  $region1: #{tpu_custom_call.1} parent=0
    #allocation3 [shape = 'u8[32768]{0}', space=vmem, size = 0x8000, scoped, tag = 'input window, operand 0, single buffered']
    #allocation4 [shape = 's32[1]{0}', space=sflag, size = 0x4, scoped, tag = 'scoped memory for tpu_custom_call.1']
    #allocation5 [shape = 's32[1]{0}', space=sflag, size = 0x4, scoped, tag = 'scoped memory for tpu_custom_call.1']
    #allocation6 [shape = 'u8[135168]{0}', space=vmem, size = 0x21000, scoped, tag = 'input window, operand 1, single buffered']
    #allocation7 [shape = 's32[1]{0}', space=sflag, size = 0x4, scoped, tag = 'scoped memory for tpu_custom_call.1']
    #allocation8 [shape = 'u8[196608]{0}', space=vmem, size = 0x30000, scoped, tag = 'input window, operand 2, single buffered']
    #allocation9 [shape = 'u8[1536]{0}', space=vmem, size = 0x800, scoped, tag = 'input window, operand 3, single buffered']
    #allocation10 [shape = 's32[1]{0}', space=sflag, size = 0x4, scoped, tag = 'scoped memory for tpu_custom_call.1']
    #allocation11 [shape = 'u8[65536]{0}', space=vmem, size = 0x10000, scoped, tag = 'input window, operand 5, single buffered']
    #allocation12 [shape = 'u8[32768]{0}', space=vmem, size = 0x8000, scoped, tag = 'output window, operand 0, single buffered']
    %12 = vsyncpa [#allocation4], 0
    %13 = vsyncpa [#allocation7], 0
    %14 = vsyncpa [#allocation10], 0
    %15 = vsyncpa [#allocation5], 0
    // Predicated region
    $region2: #{tpu_custom_call.1} parent=1 // pred_check
      _
    $region3: #{tpu_custom_call.1} parent=1 // pred_check_branch
      %17 = sbr.rel (0) target = $region5
    $region4: #{tpu_custom_call.1} parent=1 // pred_region
      %19 = vsyncadd [#allocation4], 0
      %s20 = sshll.u32 %s0, 4
      %s21 = int_to_ptr.hbm [resolvable:$true] %s20
      %s22 = sshll.u32 [#allocation3], 4
      %s23 = int_to_ptr.vmem [resolvable:$true] %s22
      %28 = dma.hbm_to_vmem [thread:$0]  %s21, 1024, %s23, [#allocation4], 128, 128, 8
    $region5: #{tpu_custom_call.1} parent=1 // pred_fallthru
      _
    // Predicated region
    $region6: #{tpu_custom_call.1} parent=1 // pred_check
      _
    $region7: #{tpu_custom_call.1} parent=1 // pred_check_branch
      %30 = sbr.rel (0) target = $region9
    $region8: #{tpu_custom_call.1} parent=1 // pred_region
      %32 = vsyncadd [#allocation7], 0
      %s33 = sshll.u32 %s1, 4
      %s34 = int_to_ptr.hbm [resolvable:$true] %s33
      %s35 = sshll.u32 [#allocation6], 4
      %s36 = int_to_ptr.vmem [resolvable:$true] %s35
      %41 = dma.hbm_to_vmem [thread:$0]  %s34, 4224, %s36, [#allocation7], 384, 384, 24
    $region9: #{tpu_custom_call.1} parent=1 // pred_fallthru
      _
    // Predicated region
    $region10: #{tpu_custom_call.1} parent=1 // pred_check
      _
    $region11: #{tpu_custom_call.1} parent=1 // pred_check_branch
      %43 = sbr.rel (0) target = $region13
    $region12: #{tpu_custom_call.1} parent=1 // pred_region
      %45 = vsyncadd [#allocation7], 0
      %s46 = sshll.u32 %s2, 4
      %s47 = int_to_ptr.hbm [resolvable:$true] %s46
      %s48 = sshll.u32 [#allocation8], 4
      %s49 = int_to_ptr.vmem [resolvable:$true] %s48
      %54 = dma.hbm_to_vmem [thread:$0]  %s47, 6144, %s49, [#allocation7], 384, 384, 24
    $region13: #{tpu_custom_call.1} parent=1 // pred_fallthru
      _
    // Predicated region
    $region14: #{tpu_custom_call.1} parent=1 // pred_check
      _
    $region15: #{tpu_custom_call.1} parent=1 // pred_check_branch
      %56 = sbr.rel (0) target = $region17
    $region16: #{tpu_custom_call.1} parent=1 // pred_region
      %58 = vsyncadd [#allocation10], 0
      %s60 = sshll.u32 %s3, 4
      %s61 = int_to_ptr.hbm [resolvable:$true] %s60
      %s62 = sshll.u32 [#allocation9], 4
      %s63 = int_to_ptr.vmem [resolvable:$true] %s62
      %65 = dma.hbm_to_vmem [thread:$0]  %s61, 48, %s63, [#allocation10]
    $region17: #{tpu_custom_call.1} parent=1 // pred_fallthru
      _
    // Predicated region
    $region18: #{tpu_custom_call.1} parent=1 // pred_check
      _
    $region19: #{tpu_custom_call.1} parent=1 // pred_check_branch
      %67 = sbr.rel (0) target = $region21
    $region20: #{tpu_custom_call.1} parent=1 // pred_region
      _
    $region21: #{tpu_custom_call.1} parent=1 // pred_fallthru
      _
    // Predicated region
    $region22: #{tpu_custom_call.1} parent=1 // pred_check
      _
    $region23: #{tpu_custom_call.1} parent=1 // pred_check_branch
      %69 = sbr.rel (0) target = $region25
    $region24: #{tpu_custom_call.1} parent=1 // pred_region
      %71 = vsyncadd [#allocation10], 0
      %s72 = sshll.u32 %s5, 4
      %s73 = int_to_ptr.hbm [resolvable:$true] %s72
      %s74 = sshll.u32 [#allocation11], 4
      %s75 = int_to_ptr.vmem [resolvable:$true] %s74
      %80 = dma.hbm_to_vmem [thread:$0]  %s73, 2048, %s75, [#allocation10], 128, 128, 8
    $region25: #{tpu_custom_call.1} parent=1 // pred_fallthru
      _
    // Predicated region
    $region26: #{tpu_custom_call.1} parent=1 // pred_check
      _
    $region27: #{tpu_custom_call.1} parent=1 // pred_check_branch
      %82 = sbr.rel (0) target = $region29
    $region28: #{tpu_custom_call.1} parent=1 // pred_region
      _
    $region29: #{tpu_custom_call.1} parent=1 // pred_fallthru
      _
    // Predicated region
    $region30: #{tpu_custom_call.1} parent=1 // pred_check
      _
    $region31: #{tpu_custom_call.1} parent=1 // pred_check_branch
      %84 = sbr.rel (0) target = $region33
    $region32: #{tpu_custom_call.1} parent=1 // pred_region
      %86 = dma.done [#allocation4], 1024
    $region33: #{tpu_custom_call.1} parent=1 // pred_fallthru
      _
    // Predicated region
    $region34: #{tpu_custom_call.1} parent=1 // pred_check
      _
    $region35: #{tpu_custom_call.1} parent=1 // pred_check_branch
      %88 = sbr.rel (0) target = $region37
    $region36: #{tpu_custom_call.1} parent=1 // pred_region
      %90 = dma.done [#allocation7], 4224
    $region37: #{tpu_custom_call.1} parent=1 // pred_fallthru
      _
    // Predicated region
    $region38: #{tpu_custom_call.1} parent=1 // pred_check
      _
    $region39: #{tpu_custom_call.1} parent=1 // pred_check_branch
      %92 = sbr.rel (0) target = $region41
    $region40: #{tpu_custom_call.1} parent=1 // pred_region
      %94 = dma.done [#allocation7], 6144
    $region41: #{tpu_custom_call.1} parent=1 // pred_fallthru
      _
    // Predicated region
    $region42: #{tpu_custom_call.1} parent=1 // pred_check
      _
    $region43: #{tpu_custom_call.1} parent=1 // pred_check_branch
      %96 = sbr.rel (0) target = $region45
    $region44: #{tpu_custom_call.1} parent=1 // pred_region
      %98 = dma.done [#allocation10], 48
    $region45: #{tpu_custom_call.1} parent=1 // pred_fallthru
      _
    // Predicated region
    $region46: #{tpu_custom_call.1} parent=1 // pred_check
      _
    $region47: #{tpu_custom_call.1} parent=1 // pred_check_branch
      %100 = sbr.rel (0) target = $region49
    $region48: #{tpu_custom_call.1} parent=1 // pred_region
      %102 = dma.done [#allocation10], 2048
    $region49: #{tpu_custom_call.1} parent=1 // pred_fallthru
      _
    %v103 = vld [vmem:[#allocation3] sm:$0xff]
    %v104 = vld [vmem:[#allocation3 + $0x8] sm:$0xff]
    %v105 = vld [vmem:[#allocation3 + $0x10] sm:$0xff]
    %v106 = vld [vmem:[#allocation3 + $0x18] sm:$0xff]
    %v107 = vld [vmem:[#allocation3 + $0x20] sm:$0xff]
    %v108 = vld [vmem:[#allocation3 + $0x28] sm:$0xff]
    %v109 = vld [vmem:[#allocation3 + $0x30] sm:$0xff]
    %v110 = vld [vmem:[#allocation3 + $0x38] sm:$0xff]
    %v111 = vld [vmem:[#allocation6] sm:$0xff]
    %v112 = vld [vmem:[#allocation6 + $0x8] sm:$0xff]
    %v113 = vld [vmem:[#allocation6 + $0x10] sm:$0xff]
    %v114 = vld [vmem:[#allocation6 + $0x18] sm:$0xff]
    %v115 = vld [vmem:[#allocation6 + $0x20] sm:$0xff]
    %v116 = vld [vmem:[#allocation6 + $0x28] sm:$0xff]
    %v117 = vld [vmem:[#allocation6 + $0x30] sm:$0xff]
    %v118 = vld [vmem:[#allocation6 + $0x38] sm:$0xff]
    %v119 = vld [vmem:[#allocation6 + $0x40] sm:$0xff]
    %v120 = vld [vmem:[#allocation6 + $0x48] sm:$0xff]
    %v121 = vld [vmem:[#allocation6 + $0x50] sm:$0xff]
    %v122 = vld [vmem:[#allocation6 + $0x58] sm:$0xff]
    %v123 = vld [vmem:[#allocation6 + $0x60] sm:$0xff]
    %v124 = vld [vmem:[#allocation6 + $0x68] sm:$0xff]
    %v125 = vld [vmem:[#allocation6 + $0x70] sm:$0xff]
    %v126 = vld [vmem:[#allocation6 + $0x78] sm:$0xff]
    %v127 = vld [vmem:[#allocation6 + $0x80] sm:$0xff]
    %v128 = vld [vmem:[#allocation6 + $0x88] sm:$0xff]
    %v129 = vld [vmem:[#allocation6 + $0x90] sm:$0xff]
    %v130 = vld [vmem:[#allocation6 + $0x98] sm:$0xff]
    %v131 = vld [vmem:[#allocation6 + $0xa0] sm:$0xff]
    %v132 = vld [vmem:[#allocation6 + $0xa8] sm:$0xff]
    %v133 = vld [vmem:[#allocation6 + $0xb0] sm:$0xff]
    %v134 = vld [vmem:[#allocation6 + $0xb8] sm:$0xff]
    %v135 = vld [vmem:[#allocation6 + $0xc0] sm:$0xff]
    %v136 = vld [vmem:[#allocation6 + $0xc8] sm:$0xff]
    %v137 = vld [vmem:[#allocation6 + $0xd0] sm:$0xff]
    %v138 = vld [vmem:[#allocation6 + $0xd8] sm:$0xff]
    %v139 = vld [vmem:[#allocation6 + $0xe0] sm:$0xff]
    %v140 = vld [vmem:[#allocation6 + $0xe8] sm:$0xff]
    %v141 = vld [vmem:[#allocation6 + $0xf0] sm:$0xff]
    %v142 = vld [vmem:[#allocation6 + $0xf8] sm:$0xff]
    %v143 = vld [vmem:[#allocation6 + $0x100] sm:$0xff]
    %v144 = vld [vmem:[#allocation9] sm:$0x7]
    %v146 = vperm.slane %v144, 0
    %v147 = vperm.slane %v144, 1
    %v148 = vperm.slane %v144, 2
    %vm152 = vcmask 719872
    %v154 = vsel %vm152, %v103, 0
    %v157 = vsel %vm152, %v104, 0
    %v160 = vsel %vm152, %v105, 0
    %v163 = vsel %vm152, %v106, 0
    %v166 = vsel %vm152, %v107, 0
    %v169 = vsel %vm152, %v108, 0
    %v172 = vsel %vm152, %v109, 0
    %v175 = vsel %vm152, %v110, 0
    %177 = vmatpush.msra.mxu0 0.0
    %178 = vmatpush.msra.mxu0 0.0
    %179 = vmatpush.msra.mxu0 0.0
    %180 = vmatpush.msra.mxu0 0.0
    %181 = vmatpush.msra.mxu0 0.0
    %182 = vmatpush.msra.mxu0 %v141
    %183 = vmatpush.msra.mxu0 %v138
    %184 = vmatpush.msra.mxu0 %v135
    %185 = vmatpush.msra.mxu0 %v132
    %186 = vmatpush.msra.mxu0 %v129
    %187 = vmatpush.msra.mxu0 %v126
    %188 = vmatpush.msra.mxu0 %v123
    %189 = vmatpush.msra.mxu0 %v120
    %190 = vmatpush.msra.mxu0 %v117
    %191 = vmatpush.msra.mxu0 %v114
    %192 = vmatpush.msra.mxu0 %v111
    %193 = vmatmul.f32.gmra.mxu0 %v154
    %v194 = vpop.f32.mrf.mxu0
    %v195 = vadd.f32 %v146, %v194
    %196 = vmatmul.f32.gmra.mxu0 %v157
    %v197 = vpop.f32.mrf.mxu0
    %v198 = vadd.f32 %v146, %v197
    %199 = vmatmul.f32.gmra.mxu0 %v160
    %v200 = vpop.f32.mrf.mxu0
    %v201 = vadd.f32 %v146, %v200
    %202 = vmatmul.f32.gmra.mxu0 %v163
    %v203 = vpop.f32.mrf.mxu0
    %v204 = vadd.f32 %v146, %v203
    %205 = vmatmul.f32.gmra.mxu0 %v166
    %v206 = vpop.f32.mrf.mxu0
    %v207 = vadd.f32 %v146, %v206
    %208 = vmatmul.f32.gmra.mxu0 %v169
    %v209 = vpop.f32.mrf.mxu0
    %v210 = vadd.f32 %v146, %v209
    %211 = vmatmul.f32.gmra.mxu0 %v172
    %v212 = vpop.f32.mrf.mxu0
    %v213 = vadd.f32 %v146, %v212
    %214 = vmatmul.f32.gmra.mxu0 %v175
    %v215 = vpop.f32.mrf.mxu0
    %v216 = vadd.f32 %v146, %v215
    %217 = vdwg.mxu0
    %218 = vmatpush.msra.mxu0 0.0
    %219 = vmatpush.msra.mxu0 0.0
    %220 = vmatpush.msra.mxu0 0.0
    %221 = vmatpush.msra.mxu0 0.0
    %222 = vmatpush.msra.mxu0 0.0
    %223 = vmatpush.msra.mxu0 %v142
    %224 = vmatpush.msra.mxu0 %v139
    %225 = vmatpush.msra.mxu0 %v136
    %226 = vmatpush.msra.mxu0 %v133
    %227 = vmatpush.msra.mxu0 %v130
    %228 = vmatpush.msra.mxu0 %v127
    %229 = vmatpush.msra.mxu0 %v124
    %230 = vmatpush.msra.mxu0 %v121
    %231 = vmatpush.msra.mxu0 %v118
    %232 = vmatpush.msra.mxu0 %v115
    %233 = vmatpush.msra.mxu0 %v112
    %234 = vmatmul.f32.gmra.mxu0 %v154
    %v235 = vpop.f32.mrf.mxu0
    %v236 = vadd.f32 %v147, %v235
    %237 = vmatmul.f32.gmra.mxu0 %v157
    %v238 = vpop.f32.mrf.mxu0
    %v239 = vadd.f32 %v147, %v238
    %240 = vmatmul.f32.gmra.mxu0 %v160
    %v241 = vpop.f32.mrf.mxu0
    %v242 = vadd.f32 %v147, %v241
    %243 = vmatmul.f32.gmra.mxu0 %v163
    %v244 = vpop.f32.mrf.mxu0
    %v245 = vadd.f32 %v147, %v244
    %246 = vmatmul.f32.gmra.mxu0 %v166
    %v247 = vpop.f32.mrf.mxu0
    %v248 = vadd.f32 %v147, %v247
    %249 = vmatmul.f32.gmra.mxu0 %v169
    %v250 = vpop.f32.mrf.mxu0
    %v251 = vadd.f32 %v147, %v250
    %252 = vmatmul.f32.gmra.mxu0 %v172
    %v253 = vpop.f32.mrf.mxu0
    %v254 = vadd.f32 %v147, %v253
    %255 = vmatmul.f32.gmra.mxu0 %v175
    %v256 = vpop.f32.mrf.mxu0
    %v257 = vadd.f32 %v147, %v256
    %258 = vdwg.mxu0
    %259 = vmatpush.msra.mxu0 0.0
    %260 = vmatpush.msra.mxu0 0.0
    %261 = vmatpush.msra.mxu0 0.0
    %262 = vmatpush.msra.mxu0 0.0
    %263 = vmatpush.msra.mxu0 0.0
    %264 = vmatpush.msra.mxu0 %v143
    %265 = vmatpush.msra.mxu0 %v140
    %266 = vmatpush.msra.mxu0 %v137
    %267 = vmatpush.msra.mxu0 %v134
    %268 = vmatpush.msra.mxu0 %v131
    %269 = vmatpush.msra.mxu0 %v128
    %270 = vmatpush.msra.mxu0 %v125
    %271 = vmatpush.msra.mxu0 %v122
    %272 = vmatpush.msra.mxu0 %v119
    %273 = vmatpush.msra.mxu0 %v116
    %274 = vmatpush.msra.mxu0 %v113
    %275 = vmatmul.f32.gmra.mxu0 %v154
    %v276 = vpop.f32.mrf.mxu0
    %v277 = vadd.f32 %v148, %v276
    %278 = vmatmul.f32.gmra.mxu0 %v157
    %v279 = vpop.f32.mrf.mxu0
    %v280 = vadd.f32 %v148, %v279
    %281 = vmatmul.f32.gmra.mxu0 %v160
    %v282 = vpop.f32.mrf.mxu0
    %v283 = vadd.f32 %v148, %v282
    %284 = vmatmul.f32.gmra.mxu0 %v163
    %v285 = vpop.f32.mrf.mxu0
    %v286 = vadd.f32 %v148, %v285
    %287 = vmatmul.f32.gmra.mxu0 %v166
    %v288 = vpop.f32.mrf.mxu0
    %v289 = vadd.f32 %v148, %v288
    %290 = vmatmul.f32.gmra.mxu0 %v169
    %v291 = vpop.f32.mrf.mxu0
    %v292 = vadd.f32 %v148, %v291
    %293 = vmatmul.f32.gmra.mxu0 %v172
    %v294 = vpop.f32.mrf.mxu0
    %v295 = vadd.f32 %v148, %v294
    %296 = vmatmul.f32.gmra.mxu0 %v175
    %v297 = vpop.f32.mrf.mxu0
    %v298 = vadd.f32 %v148, %v297
    %299 = vdwg.mxu0
    %300 = vst [vmem:[#allocation2] sm:$0xff] %v195
    %301 = vst [vmem:[#allocation2 + $0x8] sm:$0xff] %v236
    %302 = vst [vmem:[#allocation2 + $0x10] sm:$0xff] %v277
    %303 = vst [vmem:[#allocation2 + $0x18] sm:$0xff] %v198
    %304 = vst [vmem:[#allocation2 + $0x20] sm:$0xff] %v239
    %305 = vst [vmem:[#allocation2 + $0x28] sm:$0xff] %v280
    %306 = vst [vmem:[#allocation2 + $0x30] sm:$0xff] %v201
    %307 = vst [vmem:[#allocation2 + $0x38] sm:$0xff] %v242
    %308 = vst [vmem:[#allocation2 + $0x40] sm:$0xff] %v283
    %309 = vst [vmem:[#allocation2 + $0x48] sm:$0xff] %v204
    %310 = vst [vmem:[#allocation2 + $0x50] sm:$0xff] %v245
    %311 = vst [vmem:[#allocation2 + $0x58] sm:$0xff] %v286
    %312 = vst [vmem:[#allocation2 + $0x60] sm:$0xff] %v207
    %313 = vst [vmem:[#allocation2 + $0x68] sm:$0xff] %v248
    %314 = vst [vmem:[#allocation2 + $0x70] sm:$0xff] %v289
    %315 = vst [vmem:[#allocation2 + $0x78] sm:$0xff] %v210
    %316 = vst [vmem:[#allocation2 + $0x80] sm:$0xff] %v251
    %317 = vst [vmem:[#allocation2 + $0x88] sm:$0xff] %v292
    %318 = vst [vmem:[#allocation2 + $0x90] sm:$0xff] %v213
    %319 = vst [vmem:[#allocation2 + $0x98] sm:$0xff] %v254
    %320 = vst [vmem:[#allocation2 + $0xa0] sm:$0xff] %v295
    %321 = vst [vmem:[#allocation2 + $0xa8] sm:$0xff] %v216
    %322 = vst [vmem:[#allocation2 + $0xb0] sm:$0xff] %v257
    %323 = vst [vmem:[#allocation2 + $0xb8] sm:$0xff] %v298
    %v324 = vld [vmem:[#allocation8] sm:$0xff]
    %v325 = vld [vmem:[#allocation8 + $0x8] sm:$0xff]
    %v326 = vld [vmem:[#allocation8 + $0x10] sm:$0xff]
    %v327 = vld [vmem:[#allocation8 + $0x18] sm:$0xff]
    %v328 = vld [vmem:[#allocation8 + $0x20] sm:$0xff]
    %v329 = vld [vmem:[#allocation8 + $0x28] sm:$0xff]
    %v330 = vld [vmem:[#allocation8 + $0x30] sm:$0xff]
    %v331 = vld [vmem:[#allocation8 + $0x38] sm:$0xff]
    %v332 = vld [vmem:[#allocation8 + $0x40] sm:$0xff]
    %v333 = vld [vmem:[#allocation8 + $0x48] sm:$0xff]
    %v334 = vld [vmem:[#allocation8 + $0x50] sm:$0xff]
    %v335 = vld [vmem:[#allocation8 + $0x58] sm:$0xff]
    %v336 = vld [vmem:[#allocation8 + $0x60] sm:$0xff]
    %v337 = vld [vmem:[#allocation8 + $0x68] sm:$0xff]
    %v338 = vld [vmem:[#allocation8 + $0x70] sm:$0xff]
    %v339 = vld [vmem:[#allocation8 + $0x78] sm:$0xff]
    %v340 = vld [vmem:[#allocation8 + $0x80] sm:$0xff]
    %v341 = vld [vmem:[#allocation8 + $0x88] sm:$0xff]
    %v342 = vld [vmem:[#allocation8 + $0x90] sm:$0xff]
    %v343 = vld [vmem:[#allocation8 + $0x98] sm:$0xff]
    %v344 = vld [vmem:[#allocation8 + $0xa0] sm:$0xff]
    %v345 = vld [vmem:[#allocation8 + $0xa8] sm:$0xff]
    %v346 = vld [vmem:[#allocation8 + $0xb0] sm:$0xff]
    %v347 = vld [vmem:[#allocation8 + $0xb8] sm:$0xff]
    %v348 = vld [vmem:[#allocation8 + $0xc0] sm:$0xff]
    %v349 = vld [vmem:[#allocation8 + $0xc8] sm:$0xff]
    %v350 = vld [vmem:[#allocation8 + $0xd0] sm:$0xff]
    %v351 = vld [vmem:[#allocation8 + $0xd8] sm:$0xff]
    %v352 = vld [vmem:[#allocation8 + $0xe0] sm:$0xff]
    %v353 = vld [vmem:[#allocation8 + $0xe8] sm:$0xff]
    %v354 = vld [vmem:[#allocation8 + $0xf0] sm:$0xff]
    %v355 = vld [vmem:[#allocation8 + $0xf8] sm:$0xff]
    %v356 = vld [vmem:[#allocation8 + $0x100] sm:$0xff]
    %v357 = vld [vmem:[#allocation8 + $0x108] sm:$0xff]
    %v358 = vld [vmem:[#allocation8 + $0x110] sm:$0xff]
    %v359 = vld [vmem:[#allocation8 + $0x118] sm:$0xff]
    %v360 = vld [vmem:[#allocation8 + $0x120] sm:$0xff]
    %v361 = vld [vmem:[#allocation8 + $0x128] sm:$0xff]
    %v362 = vld [vmem:[#allocation8 + $0x130] sm:$0xff]
    %v363 = vld [vmem:[#allocation8 + $0x138] sm:$0xff]
    %v364 = vld [vmem:[#allocation8 + $0x140] sm:$0xff]
    %v365 = vld [vmem:[#allocation8 + $0x148] sm:$0xff]
    %v366 = vld [vmem:[#allocation8 + $0x150] sm:$0xff]
    %v367 = vld [vmem:[#allocation8 + $0x158] sm:$0xff]
    %v368 = vld [vmem:[#allocation8 + $0x160] sm:$0xff]
    %v369 = vld [vmem:[#allocation8 + $0x168] sm:$0xff]
    %v370 = vld [vmem:[#allocation8 + $0x170] sm:$0xff]
    %v371 = vld [vmem:[#allocation8 + $0x178] sm:$0xff]
    %v372 = vld [vmem:[%s4] sm:$0x1]
    %v374 = vperm.slane %v372, 0
    %v376 = vld [vmem:[#allocation2] sm:$0xff]
    %v377 = vld [vmem:[#allocation2 + $0x8] sm:$0xff]
    %v378 = vld [vmem:[#allocation2 + $0x10] sm:$0xff]
    %379 = vmatpush.msra.mxu0 %v369
    %380 = vmatpush.msra.mxu0 %v366
    %381 = vmatpush.msra.mxu0 %v363
    %382 = vmatpush.msra.mxu0 %v360
    %383 = vmatpush.msra.mxu0 %v357
    %384 = vmatpush.msra.mxu0 %v354
    %385 = vmatpush.msra.mxu0 %v351
    %386 = vmatpush.msra.mxu0 %v348
    %387 = vmatpush.msra.mxu0 %v345
    %388 = vmatpush.msra.mxu0 %v342
    %389 = vmatpush.msra.mxu0 %v339
    %390 = vmatpush.msra.mxu0 %v336
    %391 = vmatpush.msra.mxu0 %v333
    %392 = vmatpush.msra.mxu0 %v330
    %393 = vmatpush.msra.mxu0 %v327
    %394 = vmatpush.msra.mxu0 %v324
    %395 = vmatmul.f32.gmra.mxu0 0.0
    %v396 = vpop.f32.mrf.mxu0
    %v397 = vadd.f32 0.0, %v396
    %398 = vdwg.mxu0
    %399 = vmatpush.msra.mxu0 %v370
    %400 = vmatpush.msra.mxu0 %v367
    %401 = vmatpush.msra.mxu0 %v364
    %402 = vmatpush.msra.mxu0 %v361
    %403 = vmatpush.msra.mxu0 %v358
    %404 = vmatpush.msra.mxu0 %v355
    %405 = vmatpush.msra.mxu0 %v352
    %406 = vmatpush.msra.mxu0 %v349
    %407 = vmatpush.msra.mxu0 %v346
    %408 = vmatpush.msra.mxu0 %v343
    %409 = vmatpush.msra.mxu0 %v340
    %410 = vmatpush.msra.mxu0 %v337
    %411 = vmatpush.msra.mxu0 %v334
    %412 = vmatpush.msra.mxu0 %v331
    %413 = vmatpush.msra.mxu0 %v328
    %414 = vmatpush.msra.mxu0 %v325
    %415 = vmatmul.f32.gmra.mxu0 0.0
    %v416 = vpop.f32.mrf.mxu0
    %v417 = vadd.f32 0.0, %v416
    %418 = vdwg.mxu0
    %419 = vmatpush.msra.mxu0 %v371
    %420 = vmatpush.msra.mxu0 %v368
    %421 = vmatpush.msra.mxu0 %v365
    %422 = vmatpush.msra.mxu0 %v362
    %423 = vmatpush.msra.mxu0 %v359
    %424 = vmatpush.msra.mxu0 %v356
    %425 = vmatpush.msra.mxu0 %v353
    %426 = vmatpush.msra.mxu0 %v350
    %427 = vmatpush.msra.mxu0 %v347
    %428 = vmatpush.msra.mxu0 %v344
    %429 = vmatpush.msra.mxu0 %v341
    %430 = vmatpush.msra.mxu0 %v338
    %431 = vmatpush.msra.mxu0 %v335
    %432 = vmatpush.msra.mxu0 %v332
    %433 = vmatpush.msra.mxu0 %v329
    %434 = vmatpush.msra.mxu0 %v326
    %435 = vmatmul.f32.gmra.mxu0 0.0
    %v436 = vpop.f32.mrf.mxu0
    %v437 = vadd.f32 0.0, %v436
    %438 = vdwg.mxu0
    %v439 = vadd.f32 %v376, %v397
    %v440 = vxor.u32 %v439, 2147483648
    %v441 = vmul.f32 %v440, 1.442695
    %v442 = vpow.pop %v441
    %v443 = vadd.f32 %v442, 1.0
    %v444 = vrcp.pop %v443
    %v445 = vmul.f32 %v443, %v444
    %v446 = vsub.f32 1.0, %v445
    %v447 = vmul.f32 %v444, %v446
    %v448 = vadd.f32 %v444, %v447
    %vm449 = vweird.f32 %v443
    %vm450 = vweird.f32 %v444
    %vm451 = vmor %vm449, %vm450
    %v452 = vsel %vm451, %v444, %v448
    %v453 = vand.u32 2147483647, %v443
    %vm454 = vcmp.eq.f32.partialorder %v453, 8.507059e+37
    %v455 = vand.u32 %v443, 2147483648
    %v456 = vor.u32 1.1754944e-38, %v455
    %v457 = vsel %vm454, %v456, %v452
    %v458 = vmul.f32 1.0, %v457
    %v459 = vadd.f32 %v377, %v417
    %v460 = vxor.u32 %v459, 2147483648
    %v461 = vmul.f32 %v460, 1.442695
    %v462 = vpow.pop %v461
    %v463 = vadd.f32 %v462, 1.0
    %v464 = vrcp.pop %v463
    %v465 = vmul.f32 %v463, %v464
    %v466 = vsub.f32 1.0, %v465
    %v467 = vmul.f32 %v464, %v466
    %v468 = vadd.f32 %v464, %v467
    %vm469 = vweird.f32 %v463
    %vm470 = vweird.f32 %v464
    %vm471 = vmor %vm469, %vm470
    %v472 = vsel %vm471, %v464, %v468
    %v473 = vand.u32 2147483647, %v463
    %vm474 = vcmp.eq.f32.partialorder %v473, 8.507059e+37
    %v475 = vand.u32 %v463, 2147483648
    %v476 = vor.u32 1.1754944e-38, %v475
    %v477 = vsel %vm474, %v476, %v472
    %v478 = vmul.f32 1.0, %v477
    %v479 = vadd.f32 %v437, %v374
    %v480 = vmul.f32 %v458, %v479
    %v481 = vadd.f32 %v378, %v480
    %v482 = vtanh.pop %v481
    %v483 = vsub.f32 1.0, %v478
    %v484 = vmul.f32 %v483, %v482
    %v485 = vmul.f32 %v478, 0.0
    %v486 = vadd.f32 %v484, %v485
    %v487 = vld [vmem:[#allocation2 + $0x18] sm:$0xff]
    %v488 = vld [vmem:[#allocation2 + $0x20] sm:$0xff]
    %v489 = vld [vmem:[#allocation2 + $0x28] sm:$0xff]
    %490 = vmatpush.msra.mxu0 %v369
    %491 = vmatpush.msra.mxu0 %v366
    %492 = vmatpush.msra.mxu0 %v363
    %493 = vmatpush.msra.mxu0 %v360
    %494 = vmatpush.msra.mxu0 %v357
    %495 = vmatpush.msra.mxu0 %v354
    %496 = vmatpush.msra.mxu0 %v351
    %497 = vmatpush.msra.mxu0 %v348
    %498 = vmatpush.msra.mxu0 %v345
    %499 = vmatpush.msra.mxu0 %v342
    %500 = vmatpush.msra.mxu0 %v339
    %501 = vmatpush.msra.mxu0 %v336
    %502 = vmatpush.msra.mxu0 %v333
    %503 = vmatpush.msra.mxu0 %v330
    %504 = vmatpush.msra.mxu0 %v327
    %505 = vmatpush.msra.mxu0 %v324
    %506 = vmatmul.f32.gmra.mxu0 %v486
    %v507 = vpop.f32.mrf.mxu0
    %v508 = vadd.f32 0.0, %v507
    %509 = vdwg.mxu0
    %510 = vmatpush.msra.mxu0 %v370
    %511 = vmatpush.msra.mxu0 %v367
    %512 = vmatpush.msra.mxu0 %v364
    %513 = vmatpush.msra.mxu0 %v361
    %514 = vmatpush.msra.mxu0 %v358
    %515 = vmatpush.msra.mxu0 %v355
    %516 = vmatpush.msra.mxu0 %v352
    %517 = vmatpush.msra.mxu0 %v349
    %518 = vmatpush.msra.mxu0 %v346
    %519 = vmatpush.msra.mxu0 %v343
    %520 = vmatpush.msra.mxu0 %v340
    %521 = vmatpush.msra.mxu0 %v337
    %522 = vmatpush.msra.mxu0 %v334
    %523 = vmatpush.msra.mxu0 %v331
    %524 = vmatpush.msra.mxu0 %v328
    %525 = vmatpush.msra.mxu0 %v325
    %526 = vmatmul.f32.gmra.mxu0 %v486
    %v527 = vpop.f32.mrf.mxu0
    %v528 = vadd.f32 0.0, %v527
    %529 = vdwg.mxu0
    %530 = vmatpush.msra.mxu0 %v371
    %531 = vmatpush.msra.mxu0 %v368
    %532 = vmatpush.msra.mxu0 %v365
    %533 = vmatpush.msra.mxu0 %v362
    %534 = vmatpush.msra.mxu0 %v359
    %535 = vmatpush.msra.mxu0 %v356
    %536 = vmatpush.msra.mxu0 %v353
    %537 = vmatpush.msra.mxu0 %v350
    %538 = vmatpush.msra.mxu0 %v347
    %539 = vmatpush.msra.mxu0 %v344
    %540 = vmatpush.msra.mxu0 %v341
    %541 = vmatpush.msra.mxu0 %v338
    %542 = vmatpush.msra.mxu0 %v335
    %543 = vmatpush.msra.mxu0 %v332
    %544 = vmatpush.msra.mxu0 %v329
    %545 = vmatpush.msra.mxu0 %v326
    %546 = vmatmul.f32.gmra.mxu0 %v486
    %v547 = vpop.f32.mrf.mxu0
    %v548 = vadd.f32 0.0, %v547
    %549 = vdwg.mxu0
    %v550 = vadd.f32 %v487, %v508
    %v551 = vxor.u32 %v550, 2147483648
    %v552 = vmul.f32 %v551, 1.442695
    %v553 = vpow.pop %v552
    %v554 = vadd.f32 %v553, 1.0
    %v555 = vrcp.pop %v554
    %v556 = vmul.f32 %v554, %v555
    %v557 = vsub.f32 1.0, %v556
    %v558 = vmul.f32 %v555, %v557
    %v559 = vadd.f32 %v555, %v558
    %vm560 = vweird.f32 %v554
    %vm561 = vweird.f32 %v555
    %vm562 = vmor %vm560, %vm561
    %v563 = vsel %vm562, %v555, %v559
    %v564 = vand.u32 2147483647, %v554
    %vm565 = vcmp.eq.f32.partialorder %v564, 8.507059e+37
    %v566 = vand.u32 %v554, 2147483648
    %v567 = vor.u32 1.1754944e-38, %v566
    %v568 = vsel %vm565, %v567, %v563
    %v569 = vmul.f32 1.0, %v568
    %v570 = vadd.f32 %v488, %v528
    %v571 = vxor.u32 %v570, 2147483648
    %v572 = vmul.f32 %v571, 1.442695
    %v573 = vpow.pop %v572
    %v574 = vadd.f32 %v573, 1.0
    %v575 = vrcp.pop %v574
    %v576 = vmul.f32 %v574, %v575
    %v577 = vsub.f32 1.0, %v576
    %v578 = vmul.f32 %v575, %v577
    %v579 = vadd.f32 %v575, %v578
    %vm580 = vweird.f32 %v574
    %vm581 = vweird.f32 %v575
    %vm582 = vmor %vm580, %vm581
    %v583 = vsel %vm582, %v575, %v579
    %v584 = vand.u32 2147483647, %v574
    %vm585 = vcmp.eq.f32.partialorder %v584, 8.507059e+37
    %v586 = vand.u32 %v574, 2147483648
    %v587 = vor.u32 1.1754944e-38, %v586
    %v588 = vsel %vm585, %v587, %v583
    %v589 = vmul.f32 1.0, %v588
    %v590 = vadd.f32 %v548, %v374
    %v591 = vmul.f32 %v569, %v590
    %v592 = vadd.f32 %v489, %v591
    %v593 = vtanh.pop %v592
    %v594 = vsub.f32 1.0, %v589
    %v595 = vmul.f32 %v594, %v593
    %v596 = vmul.f32 %v589, %v486
    %v597 = vadd.f32 %v595, %v596
    %v598 = vld [vmem:[#allocation2 + $0x30] sm:$0xff]
    %v599 = vld [vmem:[#allocation2 + $0x38] sm:$0xff]
    %v600 = vld [vmem:[#allocation2 + $0x40] sm:$0xff]
    %601 = vmatpush.msra.mxu0 %v369
    %602 = vmatpush.msra.mxu0 %v366
    %603 = vmatpush.msra.mxu0 %v363
    %604 = vmatpush.msra.mxu0 %v360
    %605 = vmatpush.msra.mxu0 %v357
    %606 = vmatpush.msra.mxu0 %v354
    %607 = vmatpush.msra.mxu0 %v351
    %608 = vmatpush.msra.mxu0 %v348
    %609 = vmatpush.msra.mxu0 %v345
    %610 = vmatpush.msra.mxu0 %v342
    %611 = vmatpush.msra.mxu0 %v339
    %612 = vmatpush.msra.mxu0 %v336
    %613 = vmatpush.msra.mxu0 %v333
    %614 = vmatpush.msra.mxu0 %v330
    %615 = vmatpush.msra.mxu0 %v327
    %616 = vmatpush.msra.mxu0 %v324
    %617 = vmatmul.f32.gmra.mxu0 %v597
    %v618 = vpop.f32.mrf.mxu0
    %v619 = vadd.f32 0.0, %v618
    %620 = vdwg.mxu0
    %621 = vmatpush.msra.mxu0 %v370
    %622 = vmatpush.msra.mxu0 %v367
    %623 = vmatpush.msra.mxu0 %v364
    %624 = vmatpush.msra.mxu0 %v361
    %625 = vmatpush.msra.mxu0 %v358
    %626 = vmatpush.msra.mxu0 %v355
    %627 = vmatpush.msra.mxu0 %v352
    %628 = vmatpush.msra.mxu0 %v349
    %629 = vmatpush.msra.mxu0 %v346
    %630 = vmatpush.msra.mxu0 %v343
    %631 = vmatpush.msra.mxu0 %v340
    %632 = vmatpush.msra.mxu0 %v337
    %633 = vmatpush.msra.mxu0 %v334
    %634 = vmatpush.msra.mxu0 %v331
    %635 = vmatpush.msra.mxu0 %v328
    %636 = vmatpush.msra.mxu0 %v325
    %637 = vmatmul.f32.gmra.mxu0 %v597
    %v638 = vpop.f32.mrf.mxu0
    %v639 = vadd.f32 0.0, %v638
    %640 = vdwg.mxu0
    %641 = vmatpush.msra.mxu0 %v371
    %642 = vmatpush.msra.mxu0 %v368
    %643 = vmatpush.msra.mxu0 %v365
    %644 = vmatpush.msra.mxu0 %v362
    %645 = vmatpush.msra.mxu0 %v359
    %646 = vmatpush.msra.mxu0 %v356
    %647 = vmatpush.msra.mxu0 %v353
    %648 = vmatpush.msra.mxu0 %v350
    %649 = vmatpush.msra.mxu0 %v347
    %650 = vmatpush.msra.mxu0 %v344
    %651 = vmatpush.msra.mxu0 %v341
    %652 = vmatpush.msra.mxu0 %v338
    %653 = vmatpush.msra.mxu0 %v335
    %654 = vmatpush.msra.mxu0 %v332
    %655 = vmatpush.msra.mxu0 %v329
    %656 = vmatpush.msra.mxu0 %v326
    %657 = vmatmul.f32.gmra.mxu0 %v597
    %v658 = vpop.f32.mrf.mxu0
    %v659 = vadd.f32 0.0, %v658
    %660 = vdwg.mxu0
    %v661 = vadd.f32 %v598, %v619
    %v662 = vxor.u32 %v661, 2147483648
    %v663 = vmul.f32 %v662, 1.442695
    %v664 = vpow.pop %v663
    %v665 = vadd.f32 %v664, 1.0
    %v666 = vrcp.pop %v665
    %v667 = vmul.f32 %v665, %v666
    %v668 = vsub.f32 1.0, %v667
    %v669 = vmul.f32 %v666, %v668
    %v670 = vadd.f32 %v666, %v669
    %vm671 = vweird.f32 %v665
    %vm672 = vweird.f32 %v666
    %vm673 = vmor %vm671, %vm672
    %v674 = vsel %vm673, %v666, %v670
    %v675 = vand.u32 2147483647, %v665
    %vm676 = vcmp.eq.f32.partialorder %v675, 8.507059e+37
    %v677 = vand.u32 %v665, 2147483648
    %v678 = vor.u32 1.1754944e-38, %v677
    %v679 = vsel %vm676, %v678, %v674
    %v680 = vmul.f32 1.0, %v679
    %v681 = vadd.f32 %v599, %v639
    %v682 = vxor.u32 %v681, 2147483648
    %v683 = vmul.f32 %v682, 1.442695
    %v684 = vpow.pop %v683
    %v685 = vadd.f32 %v684, 1.0
    %v686 = vrcp.pop %v685
    %v687 = vmul.f32 %v685, %v686
    %v688 = vsub.f32 1.0, %v687
    %v689 = vmul.f32 %v686, %v688
    %v690 = vadd.f32 %v686, %v689
    %vm691 = vweird.f32 %v685
    %vm692 = vweird.f32 %v686
    %vm693 = vmor %vm691, %vm692
    %v694 = vsel %vm693, %v686, %v690
    %v695 = vand.u32 2147483647, %v685
    %vm696 = vcmp.eq.f32.partialorder %v695, 8.507059e+37
    %v697 = vand.u32 %v685, 2147483648
    %v698 = vor.u32 1.1754944e-38, %v697
    %v699 = vsel %vm696, %v698, %v694
    %v700 = vmul.f32 1.0, %v699
    %v701 = vadd.f32 %v659, %v374
    %v702 = vmul.f32 %v680, %v701
    %v703 = vadd.f32 %v600, %v702
    %v704 = vtanh.pop %v703
    %v705 = vsub.f32 1.0, %v700
    %v706 = vmul.f32 %v705, %v704
    %v707 = vmul.f32 %v700, %v597
    %v708 = vadd.f32 %v706, %v707
    %v709 = vld [vmem:[#allocation2 + $0x48] sm:$0xff]
    %v710 = vld [vmem:[#allocation2 + $0x50] sm:$0xff]
    %v711 = vld [vmem:[#allocation2 + $0x58] sm:$0xff]
    %712 = vmatpush.msra.mxu0 %v369
    %713 = vmatpush.msra.mxu0 %v366
    %714 = vmatpush.msra.mxu0 %v363
    %715 = vmatpush.msra.mxu0 %v360
    %716 = vmatpush.msra.mxu0 %v357
    %717 = vmatpush.msra.mxu0 %v354
    %718 = vmatpush.msra.mxu0 %v351
    %719 = vmatpush.msra.mxu0 %v348
    %720 = vmatpush.msra.mxu0 %v345
    %721 = vmatpush.msra.mxu0 %v342
    %722 = vmatpush.msra.mxu0 %v339
    %723 = vmatpush.msra.mxu0 %v336
    %724 = vmatpush.msra.mxu0 %v333
    %725 = vmatpush.msra.mxu0 %v330
    %726 = vmatpush.msra.mxu0 %v327
    %727 = vmatpush.msra.mxu0 %v324
    %728 = vmatmul.f32.gmra.mxu0 %v708
    %v729 = vpop.f32.mrf.mxu0
    %v730 = vadd.f32 0.0, %v729
    %731 = vdwg.mxu0
    %732 = vmatpush.msra.mxu0 %v370
    %733 = vmatpush.msra.mxu0 %v367
    %734 = vmatpush.msra.mxu0 %v364
    %735 = vmatpush.msra.mxu0 %v361
    %736 = vmatpush.msra.mxu0 %v358
    %737 = vmatpush.msra.mxu0 %v355
    %738 = vmatpush.msra.mxu0 %v352
    %739 = vmatpush.msra.mxu0 %v349
    %740 = vmatpush.msra.mxu0 %v346
    %741 = vmatpush.msra.mxu0 %v343
    %742 = vmatpush.msra.mxu0 %v340
    %743 = vmatpush.msra.mxu0 %v337
    %744 = vmatpush.msra.mxu0 %v334
    %745 = vmatpush.msra.mxu0 %v331
    %746 = vmatpush.msra.mxu0 %v328
    %747 = vmatpush.msra.mxu0 %v325
    %748 = vmatmul.f32.gmra.mxu0 %v708
    %v749 = vpop.f32.mrf.mxu0
    %v750 = vadd.f32 0.0, %v749
    %751 = vdwg.mxu0
    %752 = vmatpush.msra.mxu0 %v371
    %753 = vmatpush.msra.mxu0 %v368
    %754 = vmatpush.msra.mxu0 %v365
    %755 = vmatpush.msra.mxu0 %v362
    %756 = vmatpush.msra.mxu0 %v359
    %757 = vmatpush.msra.mxu0 %v356
    %758 = vmatpush.msra.mxu0 %v353
    %759 = vmatpush.msra.mxu0 %v350
    %760 = vmatpush.msra.mxu0 %v347
    %761 = vmatpush.msra.mxu0 %v344
    %762 = vmatpush.msra.mxu0 %v341
    %763 = vmatpush.msra.mxu0 %v338
    %764 = vmatpush.msra.mxu0 %v335
    %765 = vmatpush.msra.mxu0 %v332
    %766 = vmatpush.msra.mxu0 %v329
    %767 = vmatpush.msra.mxu0 %v326
    %768 = vmatmul.f32.gmra.mxu0 %v708
    %v769 = vpop.f32.mrf.mxu0
    %v770 = vadd.f32 0.0, %v769
    %771 = vdwg.mxu0
    %v772 = vadd.f32 %v709, %v730
    %v773 = vxor.u32 %v772, 2147483648
    %v774 = vmul.f32 %v773, 1.442695
    %v775 = vpow.pop %v774
    %v776 = vadd.f32 %v775, 1.0
    %v777 = vrcp.pop %v776
    %v778 = vmul.f32 %v776, %v777
    %v779 = vsub.f32 1.0, %v778
    %v780 = vmul.f32 %v777, %v779
    %v781 = vadd.f32 %v777, %v780
    %vm782 = vweird.f32 %v776
    %vm783 = vweird.f32 %v777
    %vm784 = vmor %vm782, %vm783
    %v785 = vsel %vm784, %v777, %v781
    %v786 = vand.u32 2147483647, %v776
    %vm787 = vcmp.eq.f32.partialorder %v786, 8.507059e+37
    %v788 = vand.u32 %v776, 2147483648
    %v789 = vor.u32 1.1754944e-38, %v788
    %v790 = vsel %vm787, %v789, %v785
    %v791 = vmul.f32 1.0, %v790
    %v792 = vadd.f32 %v710, %v750
    %v793 = vxor.u32 %v792, 2147483648
    %v794 = vmul.f32 %v793, 1.442695
    %v795 = vpow.pop %v794
    %v796 = vadd.f32 %v795, 1.0
    %v797 = vrcp.pop %v796
    %v798 = vmul.f32 %v796, %v797
    %v799 = vsub.f32 1.0, %v798
    %v800 = vmul.f32 %v797, %v799
    %v801 = vadd.f32 %v797, %v800
    %vm802 = vweird.f32 %v796
    %vm803 = vweird.f32 %v797
    %vm804 = vmor %vm802, %vm803
    %v805 = vsel %vm804, %v797, %v801
    %v806 = vand.u32 2147483647, %v796
    %vm807 = vcmp.eq.f32.partialorder %v806, 8.507059e+37
    %v808 = vand.u32 %v796, 2147483648
    %v809 = vor.u32 1.1754944e-38, %v808
    %v810 = vsel %vm807, %v809, %v805
    %v811 = vmul.f32 1.0, %v810
    %v812 = vadd.f32 %v770, %v374
    %v813 = vmul.f32 %v791, %v812
    %v814 = vadd.f32 %v711, %v813
    %v815 = vtanh.pop %v814
    %v816 = vsub.f32 1.0, %v811
    %v817 = vmul.f32 %v816, %v815
    %v818 = vmul.f32 %v811, %v708
    %v819 = vadd.f32 %v817, %v818
    %v820 = vld [vmem:[#allocation2 + $0x60] sm:$0xff]
    %v821 = vld [vmem:[#allocation2 + $0x68] sm:$0xff]
    %v822 = vld [vmem:[#allocation2 + $0x70] sm:$0xff]
    %823 = vmatpush.msra.mxu0 %v369
    %824 = vmatpush.msra.mxu0 %v366
    %825 = vmatpush.msra.mxu0 %v363
    %826 = vmatpush.msra.mxu0 %v360
    %827 = vmatpush.msra.mxu0 %v357
    %828 = vmatpush.msra.mxu0 %v354
    %829 = vmatpush.msra.mxu0 %v351
    %830 = vmatpush.msra.mxu0 %v348
    %831 = vmatpush.msra.mxu0 %v345
    %832 = vmatpush.msra.mxu0 %v342
    %833 = vmatpush.msra.mxu0 %v339
    %834 = vmatpush.msra.mxu0 %v336
    %835 = vmatpush.msra.mxu0 %v333
    %836 = vmatpush.msra.mxu0 %v330
    %837 = vmatpush.msra.mxu0 %v327
    %838 = vmatpush.msra.mxu0 %v324
    %839 = vmatmul.f32.gmra.mxu0 %v819
    %v840 = vpop.f32.mrf.mxu0
    %v841 = vadd.f32 0.0, %v840
    %842 = vdwg.mxu0
    %843 = vmatpush.msra.mxu0 %v370
    %844 = vmatpush.msra.mxu0 %v367
    %845 = vmatpush.msra.mxu0 %v364
    %846 = vmatpush.msra.mxu0 %v361
    %847 = vmatpush.msra.mxu0 %v358
    %848 = vmatpush.msra.mxu0 %v355
    %849 = vmatpush.msra.mxu0 %v352
    %850 = vmatpush.msra.mxu0 %v349
    %851 = vmatpush.msra.mxu0 %v346
    %852 = vmatpush.msra.mxu0 %v343
    %853 = vmatpush.msra.mxu0 %v340
    %854 = vmatpush.msra.mxu0 %v337
    %855 = vmatpush.msra.mxu0 %v334
    %856 = vmatpush.msra.mxu0 %v331
    %857 = vmatpush.msra.mxu0 %v328
    %858 = vmatpush.msra.mxu0 %v325
    %859 = vmatmul.f32.gmra.mxu0 %v819
    %v860 = vpop.f32.mrf.mxu0
    %v861 = vadd.f32 0.0, %v860
    %862 = vdwg.mxu0
    %863 = vmatpush.msra.mxu0 %v371
    %864 = vmatpush.msra.mxu0 %v368
    %865 = vmatpush.msra.mxu0 %v365
    %866 = vmatpush.msra.mxu0 %v362
    %867 = vmatpush.msra.mxu0 %v359
    %868 = vmatpush.msra.mxu0 %v356
    %869 = vmatpush.msra.mxu0 %v353
    %870 = vmatpush.msra.mxu0 %v350
    %871 = vmatpush.msra.mxu0 %v347
    %872 = vmatpush.msra.mxu0 %v344
    %873 = vmatpush.msra.mxu0 %v341
    %874 = vmatpush.msra.mxu0 %v338
    %875 = vmatpush.msra.mxu0 %v335
    %876 = vmatpush.msra.mxu0 %v332
    %877 = vmatpush.msra.mxu0 %v329
    %878 = vmatpush.msra.mxu0 %v326
    %879 = vmatmul.f32.gmra.mxu0 %v819
    %v880 = vpop.f32.mrf.mxu0
    %v881 = vadd.f32 0.0, %v880
    %882 = vdwg.mxu0
    %v883 = vadd.f32 %v820, %v841
    %v884 = vxor.u32 %v883, 2147483648
    %v885 = vmul.f32 %v884, 1.442695
    %v886 = vpow.pop %v885
    %v887 = vadd.f32 %v886, 1.0
    %v888 = vrcp.pop %v887
    %v889 = vmul.f32 %v887, %v888
    %v890 = vsub.f32 1.0, %v889
    %v891 = vmul.f32 %v888, %v890
    %v892 = vadd.f32 %v888, %v891
    %vm893 = vweird.f32 %v887
    %vm894 = vweird.f32 %v888
    %vm895 = vmor %vm893, %vm894
    %v896 = vsel %vm895, %v888, %v892
    %v897 = vand.u32 2147483647, %v887
    %vm898 = vcmp.eq.f32.partialorder %v897, 8.507059e+37
    %v899 = vand.u32 %v887, 2147483648
    %v900 = vor.u32 1.1754944e-38, %v899
    %v901 = vsel %vm898, %v900, %v896
    %v902 = vmul.f32 1.0, %v901
    %v903 = vadd.f32 %v821, %v861
    %v904 = vxor.u32 %v903, 2147483648
    %v905 = vmul.f32 %v904, 1.442695
    %v906 = vpow.pop %v905
    %v907 = vadd.f32 %v906, 1.0
    %v908 = vrcp.pop %v907
    %v909 = vmul.f32 %v907, %v908
    %v910 = vsub.f32 1.0, %v909
    %v911 = vmul.f32 %v908, %v910
    %v912 = vadd.f32 %v908, %v911
    %vm913 = vweird.f32 %v907
    %vm914 = vweird.f32 %v908
    %vm915 = vmor %vm913, %vm914
    %v916 = vsel %vm915, %v908, %v912
    %v917 = vand.u32 2147483647, %v907
    %vm918 = vcmp.eq.f32.partialorder %v917, 8.507059e+37
    %v919 = vand.u32 %v907, 2147483648
    %v920 = vor.u32 1.1754944e-38, %v919
    %v921 = vsel %vm918, %v920, %v916
    %v922 = vmul.f32 1.0, %v921
    %v923 = vadd.f32 %v881, %v374
    %v924 = vmul.f32 %v902, %v923
    %v925 = vadd.f32 %v822, %v924
    %v926 = vtanh.pop %v925
    %v927 = vsub.f32 1.0, %v922
    %v928 = vmul.f32 %v927, %v926
    %v929 = vmul.f32 %v922, %v819
    %v930 = vadd.f32 %v928, %v929
    %v931 = vld [vmem:[#allocation2 + $0x78] sm:$0xff]
    %v932 = vld [vmem:[#allocation2 + $0x80] sm:$0xff]
    %v933 = vld [vmem:[#allocation2 + $0x88] sm:$0xff]
    %934 = vmatpush.msra.mxu0 %v369
    %935 = vmatpush.msra.mxu0 %v366
    %936 = vmatpush.msra.mxu0 %v363
    %937 = vmatpush.msra.mxu0 %v360
    %938 = vmatpush.msra.mxu0 %v357
    %939 = vmatpush.msra.mxu0 %v354
    %940 = vmatpush.msra.mxu0 %v351
    %941 = vmatpush.msra.mxu0 %v348
    %942 = vmatpush.msra.mxu0 %v345
    %943 = vmatpush.msra.mxu0 %v342
    %944 = vmatpush.msra.mxu0 %v339
    %945 = vmatpush.msra.mxu0 %v336
    %946 = vmatpush.msra.mxu0 %v333
    %947 = vmatpush.msra.mxu0 %v330
    %948 = vmatpush.msra.mxu0 %v327
    %949 = vmatpush.msra.mxu0 %v324
    %950 = vmatmul.f32.gmra.mxu0 %v930
    %v951 = vpop.f32.mrf.mxu0
    %v952 = vadd.f32 0.0, %v951
    %953 = vdwg.mxu0
    %954 = vmatpush.msra.mxu0 %v370
    %955 = vmatpush.msra.mxu0 %v367
    %956 = vmatpush.msra.mxu0 %v364
    %957 = vmatpush.msra.mxu0 %v361
    %958 = vmatpush.msra.mxu0 %v358
    %959 = vmatpush.msra.mxu0 %v355
    %960 = vmatpush.msra.mxu0 %v352
    %961 = vmatpush.msra.mxu0 %v349
    %962 = vmatpush.msra.mxu0 %v346
    %963 = vmatpush.msra.mxu0 %v343
    %964 = vmatpush.msra.mxu0 %v340
    %965 = vmatpush.msra.mxu0 %v337
    %966 = vmatpush.msra.mxu0 %v334
    %967 = vmatpush.msra.mxu0 %v331
    %968 = vmatpush.msra.mxu0 %v328
    %969 = vmatpush.msra.mxu0 %v325
    %970 = vmatmul.f32.gmra.mxu0 %v930
    %v971 = vpop.f32.mrf.mxu0
    %v972 = vadd.f32 0.0, %v971
    %973 = vdwg.mxu0
    %974 = vmatpush.msra.mxu0 %v371
    %975 = vmatpush.msra.mxu0 %v368
    %976 = vmatpush.msra.mxu0 %v365
    %977 = vmatpush.msra.mxu0 %v362
    %978 = vmatpush.msra.mxu0 %v359
    %979 = vmatpush.msra.mxu0 %v356
    %980 = vmatpush.msra.mxu0 %v353
    %981 = vmatpush.msra.mxu0 %v350
    %982 = vmatpush.msra.mxu0 %v347
    %983 = vmatpush.msra.mxu0 %v344
    %984 = vmatpush.msra.mxu0 %v341
    %985 = vmatpush.msra.mxu0 %v338
    %986 = vmatpush.msra.mxu0 %v335
    %987 = vmatpush.msra.mxu0 %v332
    %988 = vmatpush.msra.mxu0 %v329
    %989 = vmatpush.msra.mxu0 %v326
    %990 = vmatmul.f32.gmra.mxu0 %v930
    %v991 = vpop.f32.mrf.mxu0
    %v992 = vadd.f32 0.0, %v991
    %993 = vdwg.mxu0
    %v994 = vadd.f32 %v931, %v952
    %v995 = vxor.u32 %v994, 2147483648
    %v996 = vmul.f32 %v995, 1.442695
    %v997 = vpow.pop %v996
    %v998 = vadd.f32 %v997, 1.0
    %v999 = vrcp.pop %v998
    %v1000 = vmul.f32 %v998, %v999
    %v1001 = vsub.f32 1.0, %v1000
    %v1002 = vmul.f32 %v999, %v1001
    %v1003 = vadd.f32 %v999, %v1002
    %vm1004 = vweird.f32 %v998
    %vm1005 = vweird.f32 %v999
    %vm1006 = vmor %vm1004, %vm1005
    %v1007 = vsel %vm1006, %v999, %v1003
    %v1008 = vand.u32 2147483647, %v998
    %vm1009 = vcmp.eq.f32.partialorder %v1008, 8.507059e+37
    %v1010 = vand.u32 %v998, 2147483648
    %v1011 = vor.u32 1.1754944e-38, %v1010
    %v1012 = vsel %vm1009, %v1011, %v1007
    %v1013 = vmul.f32 1.0, %v1012
    %v1014 = vadd.f32 %v932, %v972
    %v1015 = vxor.u32 %v1014, 2147483648
    %v1016 = vmul.f32 %v1015, 1.442695
    %v1017 = vpow.pop %v1016
    %v1018 = vadd.f32 %v1017, 1.0
    %v1019 = vrcp.pop %v1018
    %v1020 = vmul.f32 %v1018, %v1019
    %v1021 = vsub.f32 1.0, %v1020
    %v1022 = vmul.f32 %v1019, %v1021
    %v1023 = vadd.f32 %v1019, %v1022
    %vm1024 = vweird.f32 %v1018
    %vm1025 = vweird.f32 %v1019
    %vm1026 = vmor %vm1024, %vm1025
    %v1027 = vsel %vm1026, %v1019, %v1023
    %v1028 = vand.u32 2147483647, %v1018
    %vm1029 = vcmp.eq.f32.partialorder %v1028, 8.507059e+37
    %v1030 = vand.u32 %v1018, 2147483648
    %v1031 = vor.u32 1.1754944e-38, %v1030
    %v1032 = vsel %vm1029, %v1031, %v1027
    %v1033 = vmul.f32 1.0, %v1032
    %v1034 = vadd.f32 %v992, %v374
    %v1035 = vmul.f32 %v1013, %v1034
    %v1036 = vadd.f32 %v933, %v1035
    %v1037 = vtanh.pop %v1036
    %v1038 = vsub.f32 1.0, %v1033
    %v1039 = vmul.f32 %v1038, %v1037
    %v1040 = vmul.f32 %v1033, %v930
    %v1041 = vadd.f32 %v1039, %v1040
    %v1042 = vld [vmem:[#allocation2 + $0x90] sm:$0xff]
    %v1043 = vld [vmem:[#allocation2 + $0x98] sm:$0xff]
    %v1044 = vld [vmem:[#allocation2 + $0xa0] sm:$0xff]
    %1045 = vmatpush.msra.mxu0 %v369
    %1046 = vmatpush.msra.mxu0 %v366
    %1047 = vmatpush.msra.mxu0 %v363
    %1048 = vmatpush.msra.mxu0 %v360
    %1049 = vmatpush.msra.mxu0 %v357
    %1050 = vmatpush.msra.mxu0 %v354
    %1051 = vmatpush.msra.mxu0 %v351
    %1052 = vmatpush.msra.mxu0 %v348
    %1053 = vmatpush.msra.mxu0 %v345
    %1054 = vmatpush.msra.mxu0 %v342
    %1055 = vmatpush.msra.mxu0 %v339
    %1056 = vmatpush.msra.mxu0 %v336
    %1057 = vmatpush.msra.mxu0 %v333
    %1058 = vmatpush.msra.mxu0 %v330
    %1059 = vmatpush.msra.mxu0 %v327
    %1060 = vmatpush.msra.mxu0 %v324
    %1061 = vmatmul.f32.gmra.mxu0 %v1041
    %v1062 = vpop.f32.mrf.mxu0
    %v1063 = vadd.f32 0.0, %v1062
    %1064 = vdwg.mxu0
    %1065 = vmatpush.msra.mxu0 %v370
    %1066 = vmatpush.msra.mxu0 %v367
    %1067 = vmatpush.msra.mxu0 %v364
    %1068 = vmatpush.msra.mxu0 %v361
    %1069 = vmatpush.msra.mxu0 %v358
    %1070 = vmatpush.msra.mxu0 %v355
    %1071 = vmatpush.msra.mxu0 %v352
    %1072 = vmatpush.msra.mxu0 %v349
    %1073 = vmatpush.msra.mxu0 %v346
    %1074 = vmatpush.msra.mxu0 %v343
    %1075 = vmatpush.msra.mxu0 %v340
    %1076 = vmatpush.msra.mxu0 %v337
    %1077 = vmatpush.msra.mxu0 %v334
    %1078 = vmatpush.msra.mxu0 %v331
    %1079 = vmatpush.msra.mxu0 %v328
    %1080 = vmatpush.msra.mxu0 %v325
    %1081 = vmatmul.f32.gmra.mxu0 %v1041
    %v1082 = vpop.f32.mrf.mxu0
    %v1083 = vadd.f32 0.0, %v1082
    %1084 = vdwg.mxu0
    %1085 = vmatpush.msra.mxu0 %v371
    %1086 = vmatpush.msra.mxu0 %v368
    %1087 = vmatpush.msra.mxu0 %v365
    %1088 = vmatpush.msra.mxu0 %v362
    %1089 = vmatpush.msra.mxu0 %v359
    %1090 = vmatpush.msra.mxu0 %v356
    %1091 = vmatpush.msra.mxu0 %v353
    %1092 = vmatpush.msra.mxu0 %v350
    %1093 = vmatpush.msra.mxu0 %v347
    %1094 = vmatpush.msra.mxu0 %v344
    %1095 = vmatpush.msra.mxu0 %v341
    %1096 = vmatpush.msra.mxu0 %v338
    %1097 = vmatpush.msra.mxu0 %v335
    %1098 = vmatpush.msra.mxu0 %v332
    %1099 = vmatpush.msra.mxu0 %v329
    %1100 = vmatpush.msra.mxu0 %v326
    %1101 = vmatmul.f32.gmra.mxu0 %v1041
    %v1102 = vpop.f32.mrf.mxu0
    %v1103 = vadd.f32 0.0, %v1102
    %1104 = vdwg.mxu0
    %v1105 = vadd.f32 %v1042, %v1063
    %v1106 = vxor.u32 %v1105, 2147483648
    %v1107 = vmul.f32 %v1106, 1.442695
    %v1108 = vpow.pop %v1107
    %v1109 = vadd.f32 %v1108, 1.0
    %v1110 = vrcp.pop %v1109
    %v1111 = vmul.f32 %v1109, %v1110
    %v1112 = vsub.f32 1.0, %v1111
    %v1113 = vmul.f32 %v1110, %v1112
    %v1114 = vadd.f32 %v1110, %v1113
    %vm1115 = vweird.f32 %v1109
    %vm1116 = vweird.f32 %v1110
    %vm1117 = vmor %vm1115, %vm1116
    %v1118 = vsel %vm1117, %v1110, %v1114
    %v1119 = vand.u32 2147483647, %v1109
    %vm1120 = vcmp.eq.f32.partialorder %v1119, 8.507059e+37
    %v1121 = vand.u32 %v1109, 2147483648
    %v1122 = vor.u32 1.1754944e-38, %v1121
    %v1123 = vsel %vm1120, %v1122, %v1118
    %v1124 = vmul.f32 1.0, %v1123
    %v1125 = vadd.f32 %v1043, %v1083
    %v1126 = vxor.u32 %v1125, 2147483648
    %v1127 = vmul.f32 %v1126, 1.442695
    %v1128 = vpow.pop %v1127
    %v1129 = vadd.f32 %v1128, 1.0
    %v1130 = vrcp.pop %v1129
    %v1131 = vmul.f32 %v1129, %v1130
    %v1132 = vsub.f32 1.0, %v1131
    %v1133 = vmul.f32 %v1130, %v1132
    %v1134 = vadd.f32 %v1130, %v1133
    %vm1135 = vweird.f32 %v1129
    %vm1136 = vweird.f32 %v1130
    %vm1137 = vmor %vm1135, %vm1136
    %v1138 = vsel %vm1137, %v1130, %v1134
    %v1139 = vand.u32 2147483647, %v1129
    %vm1140 = vcmp.eq.f32.partialorder %v1139, 8.507059e+37
    %v1141 = vand.u32 %v1129, 2147483648
    %v1142 = vor.u32 1.1754944e-38, %v1141
    %v1143 = vsel %vm1140, %v1142, %v1138
    %v1144 = vmul.f32 1.0, %v1143
    %v1145 = vadd.f32 %v1103, %v374
    %v1146 = vmul.f32 %v1124, %v1145
    %v1147 = vadd.f32 %v1044, %v1146
    %v1148 = vtanh.pop %v1147
    %v1149 = vsub.f32 1.0, %v1144
    %v1150 = vmul.f32 %v1149, %v1148
    %v1151 = vmul.f32 %v1144, %v1041
    %v1152 = vadd.f32 %v1150, %v1151
    %v1153 = vld [vmem:[#allocation2 + $0xa8] sm:$0xff]
    %v1154 = vld [vmem:[#allocation2 + $0xb0] sm:$0xff]
    %v1155 = vld [vmem:[#allocation2 + $0xb8] sm:$0xff]
    %1156 = vmatpush.msra.mxu0 %v369
    %1157 = vmatpush.msra.mxu0 %v366
    %1158 = vmatpush.msra.mxu0 %v363
    %1159 = vmatpush.msra.mxu0 %v360
    %1160 = vmatpush.msra.mxu0 %v357
    %1161 = vmatpush.msra.mxu0 %v354
    %1162 = vmatpush.msra.mxu0 %v351
    %1163 = vmatpush.msra.mxu0 %v348
    %1164 = vmatpush.msra.mxu0 %v345
    %1165 = vmatpush.msra.mxu0 %v342
    %1166 = vmatpush.msra.mxu0 %v339
    %1167 = vmatpush.msra.mxu0 %v336
    %1168 = vmatpush.msra.mxu0 %v333
    %1169 = vmatpush.msra.mxu0 %v330
    %1170 = vmatpush.msra.mxu0 %v327
    %1171 = vmatpush.msra.mxu0 %v324
    %1172 = vmatmul.f32.gmra.mxu0 %v1152
    %v1173 = vpop.f32.mrf.mxu0
    %v1174 = vadd.f32 0.0, %v1173
    %1175 = vdwg.mxu0
    %1176 = vmatpush.msra.mxu0 %v370
    %1177 = vmatpush.msra.mxu0 %v367
    %1178 = vmatpush.msra.mxu0 %v364
    %1179 = vmatpush.msra.mxu0 %v361
    %1180 = vmatpush.msra.mxu0 %v358
    %1181 = vmatpush.msra.mxu0 %v355
    %1182 = vmatpush.msra.mxu0 %v352
    %1183 = vmatpush.msra.mxu0 %v349
    %1184 = vmatpush.msra.mxu0 %v346
    %1185 = vmatpush.msra.mxu0 %v343
    %1186 = vmatpush.msra.mxu0 %v340
    %1187 = vmatpush.msra.mxu0 %v337
    %1188 = vmatpush.msra.mxu0 %v334
    %1189 = vmatpush.msra.mxu0 %v331
    %1190 = vmatpush.msra.mxu0 %v328
    %1191 = vmatpush.msra.mxu0 %v325
    %1192 = vmatmul.f32.gmra.mxu0 %v1152
    %v1193 = vpop.f32.mrf.mxu0
    %v1194 = vadd.f32 0.0, %v1193
    %1195 = vdwg.mxu0
    %1196 = vmatpush.msra.mxu0 %v371
    %1197 = vmatpush.msra.mxu0 %v368
    %1198 = vmatpush.msra.mxu0 %v365
    %1199 = vmatpush.msra.mxu0 %v362
    %1200 = vmatpush.msra.mxu0 %v359
    %1201 = vmatpush.msra.mxu0 %v356
    %1202 = vmatpush.msra.mxu0 %v353
    %1203 = vmatpush.msra.mxu0 %v350
    %1204 = vmatpush.msra.mxu0 %v347
    %1205 = vmatpush.msra.mxu0 %v344
    %1206 = vmatpush.msra.mxu0 %v341
    %1207 = vmatpush.msra.mxu0 %v338
    %1208 = vmatpush.msra.mxu0 %v335
    %1209 = vmatpush.msra.mxu0 %v332
    %1210 = vmatpush.msra.mxu0 %v329
    %1211 = vmatpush.msra.mxu0 %v326
    %1212 = vmatmul.f32.gmra.mxu0 %v1152
    %v1213 = vpop.f32.mrf.mxu0
    %v1214 = vadd.f32 0.0, %v1213
    %1215 = vdwg.mxu0
    %v1216 = vadd.f32 %v1153, %v1174
    %v1217 = vxor.u32 %v1216, 2147483648
    %v1218 = vmul.f32 %v1217, 1.442695
    %v1219 = vpow.pop %v1218
    %v1220 = vadd.f32 %v1219, 1.0
    %v1221 = vrcp.pop %v1220
    %v1222 = vmul.f32 %v1220, %v1221
    %v1223 = vsub.f32 1.0, %v1222
    %v1224 = vmul.f32 %v1221, %v1223
    %v1225 = vadd.f32 %v1221, %v1224
    %vm1226 = vweird.f32 %v1220
    %vm1227 = vweird.f32 %v1221
    %vm1228 = vmor %vm1226, %vm1227
    %v1229 = vsel %vm1228, %v1221, %v1225
    %v1230 = vand.u32 2147483647, %v1220
    %vm1231 = vcmp.eq.f32.partialorder %v1230, 8.507059e+37
    %v1232 = vand.u32 %v1220, 2147483648
    %v1233 = vor.u32 1.1754944e-38, %v1232
    %v1234 = vsel %vm1231, %v1233, %v1229
    %v1235 = vmul.f32 1.0, %v1234
    %v1236 = vadd.f32 %v1154, %v1194
    %v1237 = vxor.u32 %v1236, 2147483648
    %v1238 = vmul.f32 %v1237, 1.442695
    %v1239 = vpow.pop %v1238
    %v1240 = vadd.f32 %v1239, 1.0
    %v1241 = vrcp.pop %v1240
    %v1242 = vmul.f32 %v1240, %v1241
    %v1243 = vsub.f32 1.0, %v1242
    %v1244 = vmul.f32 %v1241, %v1243
    %v1245 = vadd.f32 %v1241, %v1244
    %vm1246 = vweird.f32 %v1240
    %vm1247 = vweird.f32 %v1241
    %vm1248 = vmor %vm1246, %vm1247
    %v1249 = vsel %vm1248, %v1241, %v1245
    %v1250 = vand.u32 2147483647, %v1240
    %vm1251 = vcmp.eq.f32.partialorder %v1250, 8.507059e+37
    %v1252 = vand.u32 %v1240, 2147483648
    %v1253 = vor.u32 1.1754944e-38, %v1252
    %v1254 = vsel %vm1251, %v1253, %v1249
    %v1255 = vmul.f32 1.0, %v1254
    %v1256 = vadd.f32 %v1214, %v374
    %v1257 = vmul.f32 %v1235, %v1256
    %v1258 = vadd.f32 %v1155, %v1257
    %v1259 = vtanh.pop %v1258
    %v1260 = vsub.f32 1.0, %v1255
    %v1261 = vmul.f32 %v1260, %v1259
    %v1262 = vmul.f32 %v1255, %v1152
    %v1263 = vadd.f32 %v1261, %v1262
    %v1264 = vld [vmem:[#allocation11] sm:$0xff]
    %v1265 = vld [vmem:[#allocation11 + $0x8] sm:$0xff]
    %v1266 = vld [vmem:[#allocation11 + $0x10] sm:$0xff]
    %v1267 = vld [vmem:[#allocation11 + $0x18] sm:$0xff]
    %v1268 = vld [vmem:[#allocation11 + $0x20] sm:$0xff]
    %v1269 = vld [vmem:[#allocation11 + $0x28] sm:$0xff]
    %v1270 = vld [vmem:[#allocation11 + $0x30] sm:$0xff]
    %v1271 = vld [vmem:[#allocation11 + $0x38] sm:$0xff]
    %v1272 = vld [vmem:[#allocation11 + $0x40] sm:$0xff]
    %v1273 = vld [vmem:[#allocation11 + $0x48] sm:$0xff]
    %v1274 = vld [vmem:[#allocation11 + $0x50] sm:$0xff]
    %v1275 = vld [vmem:[#allocation11 + $0x58] sm:$0xff]
    %v1276 = vld [vmem:[#allocation11 + $0x60] sm:$0xff]
    %v1277 = vld [vmem:[#allocation11 + $0x68] sm:$0xff]
    %v1278 = vld [vmem:[#allocation11 + $0x70] sm:$0xff]
    %v1279 = vld [vmem:[#allocation11 + $0x78] sm:$0xff]
    %v1280 = vld [vmem:[%s6] sm:$0x1]
    %v1282 = vperm.slane %v1280, 0
    %1284 = vmatpush.msra.mxu0 %v1279
    %1285 = vmatpush.msra.mxu0 %v1278
    %1286 = vmatpush.msra.mxu0 %v1277
    %1287 = vmatpush.msra.mxu0 %v1276
    %1288 = vmatpush.msra.mxu0 %v1275
    %1289 = vmatpush.msra.mxu0 %v1274
    %1290 = vmatpush.msra.mxu0 %v1273
    %1291 = vmatpush.msra.mxu0 %v1272
    %1292 = vmatpush.msra.mxu0 %v1271
    %1293 = vmatpush.msra.mxu0 %v1270
    %1294 = vmatpush.msra.mxu0 %v1269
    %1295 = vmatpush.msra.mxu0 %v1268
    %1296 = vmatpush.msra.mxu0 %v1267
    %1297 = vmatpush.msra.mxu0 %v1266
    %1298 = vmatpush.msra.mxu0 %v1265
    %1299 = vmatpush.msra.mxu0 %v1264
    %1300 = vmatmul.f32.gmra.mxu0 %v486
    %v1301 = vpop.f32.mrf.mxu0
    %v1302 = vadd.f32 %v1282, %v1301
    %1303 = vmatmul.f32.gmra.mxu0 %v597
    %v1304 = vpop.f32.mrf.mxu0
    %v1305 = vadd.f32 %v1282, %v1304
    %1306 = vmatmul.f32.gmra.mxu0 %v708
    %v1307 = vpop.f32.mrf.mxu0
    %v1308 = vadd.f32 %v1282, %v1307
    %1309 = vmatmul.f32.gmra.mxu0 %v819
    %v1310 = vpop.f32.mrf.mxu0
    %v1311 = vadd.f32 %v1282, %v1310
    %1312 = vmatmul.f32.gmra.mxu0 %v930
    %v1313 = vpop.f32.mrf.mxu0
    %v1314 = vadd.f32 %v1282, %v1313
    %1315 = vmatmul.f32.gmra.mxu0 %v1041
    %v1316 = vpop.f32.mrf.mxu0
    %v1317 = vadd.f32 %v1282, %v1316
    %1318 = vmatmul.f32.gmra.mxu0 %v1152
    %v1319 = vpop.f32.mrf.mxu0
    %v1320 = vadd.f32 %v1282, %v1319
    %1321 = vmatmul.f32.gmra.mxu0 %v1263
    %v1322 = vpop.f32.mrf.mxu0
    %v1323 = vadd.f32 %v1282, %v1322
    %1324 = vdwg.mxu0
    %1325 = vst [vmem:[#allocation12] sm:$0xff] %v1302
    %1326 = vst [vmem:[#allocation12 + $0x8] sm:$0xff] %v1305
    %1327 = vst [vmem:[#allocation12 + $0x10] sm:$0xff] %v1308
    %1328 = vst [vmem:[#allocation12 + $0x18] sm:$0xff] %v1311
    %1329 = vst [vmem:[#allocation12 + $0x20] sm:$0xff] %v1314
    %1330 = vst [vmem:[#allocation12 + $0x28] sm:$0xff] %v1317
    %1331 = vst [vmem:[#allocation12 + $0x30] sm:$0xff] %v1320
    %1332 = vst [vmem:[#allocation12 + $0x38] sm:$0xff] %v1323
    // Predicated region
    $region50: #{tpu_custom_call.1} parent=1 // pred_check
      _
    $region51: #{tpu_custom_call.1} parent=1 // pred_check_branch
      %1334 = sbr.rel (0) target = $region53
    $region52: #{tpu_custom_call.1} parent=1 // pred_region
      %1336 = vsyncadd [#allocation5], 0
      %s1337 = sshll.u32 [#allocation12], 4
      %s1338 = int_to_ptr.vmem [resolvable:$true] %s1337
      %s1339 = sshll.u32 %s7, 4
      %s1340 = int_to_ptr.hbm [resolvable:$true] %s1339
      %1345 = dma.vmem_to_hbm [thread:$0]  %s1338, 1024, %s1340, [#allocation5], 128, 128, 8
    $region53: #{tpu_custom_call.1} parent=1 // pred_fallthru
      _
    // Predicated region
    $region54: #{tpu_custom_call.1} parent=1 // pred_check
      _
    $region55: #{tpu_custom_call.1} parent=1 // pred_check_branch
      %1347 = sbr.rel (0) target = $region57
    $region56: #{tpu_custom_call.1} parent=1 // pred_region
      %1349 = dma.done [#allocation5], 1024
    $region57: #{tpu_custom_call.1} parent=1 // pred_fallthru
      _
    %1350 = vsyncpa [#allocation4], 1
    %1351 = vsyncpa [#allocation7], 1
    %1352 = vsyncpa [#allocation10], 1
    %1353 = vsyncpa [#allocation5], 1

</llo_original>
